<compile_context>
chip_gen: v7x
topology: tpu7x:2x2x1
jax: 0.10.0
libtpu: 0.0.40
codegen_flags: <defaults>
</compile_context>

<pallas_src>
import functools
import math

import jax
import jax.numpy as jnp
from jax import lax
from jax.experimental import pallas as pl
from jax.experimental.pallas import tpu as pltpu


def _round_up(v, m):
    return -(-v // m) * m


def _pseudomax_kernel(x_ref, o_ref, halo_ref, *, mode, alpha, k, stride, pad,
                      eps, Hk, Wo):
    """One grid step over a block of TC = (batch*channel) planes.

    halo_ref: (planes*TC, Hs, W) f32 VMEM scratch. Rows [pad, pad+H) hold e (plane 0)
    and x*e (plane 1, softmax only); all other rows are (re)zeroed each step so the k
    sublane-shifted Ref reads below see the conv zero halo. Left/right zero pads are
    folded into the band matrix instead of the scratch (no lane-offset writes).
    """
    tc, H, W = x_ref.shape
    nb, Hs, _ = halo_ref.shape            # nb = planes * tc
    Hk8 = _round_up(Hk, 8)                # multiple of 8 -> free reshape before the matmul

    x = x_ref[...].astype(jnp.float32)
    e = jnp.exp(alpha * x)                # NOTE: overflows for huge x, same as the torch ref

    # --- refresh the zero halo rows (cheap: border rows only), then write the data rows ---
    if pad > 0:
        halo_ref[:, 0:pad, :] = jnp.zeros((nb, pad, W), jnp.float32)
    nbot = Hs - (pad + H)
    if nbot > 0:
        halo_ref[:, pad + H:, :] = jnp.zeros((nb, nbot, W), jnp.float32)
    halo_ref[0:tc, pad:pad + H, :] = e
    if mode == 'alpha-softmax':
        halo_ref[tc:2 * tc, pad:pad + H, :] = x * e

    # --- H (sublane) box sum: k sublane-offset Ref reads + VALU adds (shared by planes) ---
    s = halo_ref[:, 0:Hk8, :]
    for di in range(1, k):
        s = s + halo_ref[:, di:di + Hk8, :]          # (nb, Hk8, W)

    # --- W (lane) box sum on the MXU: banded 0/1 matmul.
    #     band[w, o] = 1  iff  o*stride - pad <= w < o*stride - pad + k
    #     (folds `start`, the left zero pad and the W stride; out-of-range columns are
    #      exactly the zero pads, so dropping them from the sum is exact). ---
    w_i = lax.broadcasted_iota(jnp.int32, (W, Wo), 0)
    o_i = lax.broadcasted_iota(jnp.int32, (W, Wo), 1)
    lo = o_i * stride - pad
    band = ((w_i >= lo) & (w_i < lo + k)).astype(jnp.float32)

    flat = s.reshape(nb * Hk8, W)                    # free: Hk8 % 8 == 0, last dim unchanged
    r = jnp.dot(flat, band, preferred_element_type=jnp.float32,
                precision=lax.Precision.HIGHEST)     # exact-ish box sums on the idle MXU
    r = r.reshape(nb, Hk8, Wo)

    if mode == 'alpha-softmax':
        den = r[0:tc, 0:Hk, :] + eps
        num = r[tc:2 * tc, 0:Hk, :]
        inv = pl.reciprocal(den, approx=True)        # EUP slot, keeps the VALU free
        inv = inv * (2.0 - den * inv)                # one Newton step -> ~f32 accuracy
        pmax = num * inv
    else:  # 'alpha-quasimax'
        den = r[0:tc, 0:Hk, :]
        pmax = (jnp.log(den) - 2.0 * math.log(float(k))) * (1.0 / alpha)

    o_ref[...] = pmax.astype(o_ref.dtype)


def _vmem_capacity_bytes():
    try:
        return int(pltpu.get_tpu_info().vmem_capacity_bytes)
    except Exception:
        return 64 * 1024 * 1024          # v7x per-TC physical VMEM; safe everywhere


def _tile_bytes(h, w):
    """f32 VMEM footprint of an (h, w) plane after (8, 128) tile padding."""
    return _round_up(max(h, 1), 8) * _round_up(max(w, 1), 128) * 4


def _pick_channel_block(nc, H, W, Hk, Wo, Hs, planes, cap):
    """Largest channel block whose working set fits ~40% of this generation's VMEM."""
    Hk8 = _round_up(Hk, 8)
    per_chan = (2 * _tile_bytes(H, W)                     # double-buffered input block
                + 2 * _tile_bytes(Hk, Wo)                 # double-buffered output block
                + planes * _tile_bytes(Hs, W)             # persistent halo scratch
                + planes * (_tile_bytes(H, W)             # e / x*e values
                            + 2 * _tile_bytes(Hk8, W)     # shifted-add accumulator + matmul lhs
                            + 2 * _tile_bytes(Hk8, Wo)))  # matmul result / pmax
    budget = int(cap * 0.40)             # ~26 MiB on v7x (64 MiB), ~51 MiB on v5e/v6e (128 MiB)
    tc = max(1, budget // max(per_chan, 1))
    return min(tc, nc)


def pseudomax_pooling_2d(x, mode='alpha-softmax', alpha=4.0, kernel_size=3,
                         stride=1, padding=0):
    assert mode in ('alpha-softmax', 'alpha-quasimax')
    k = int(kernel_size)
    stride = int(stride)
    p = (k - 1) // 2
    assert padding <= p
    start = p - padding

    N, C, H, W = x.shape
    NC = N * C
    Hc = H + 2 * p - k + 1               # box-filter ("conv") output extent
    Wc = W + 2 * p - k + 1
    Hk = Hc - start                      # kernel output rows (start folded in-kernel)
    Wk = Wc - start
    Wo = -(-Wk // stride)                # W stride folded into the in-kernel band matmul
    Hk8 = _round_up(Hk, 8)
    Hs = Hk8 + k - 1                     # scratch rows: Hk8 shifted-read rows + (k-1) halo
    planes = 2 if mode == 'alpha-softmax' else 1

    xr = x.reshape(NC, H, W)             # row-major reshape: no data movement, no HBM pad

    cap = _vmem_capacity_bytes()
    tc = _pick_channel_block(NC, H, W, Hk, Wo, Hs, planes, cap)
    # Ragged last block is fine: out-of-range output writes are masked by Pallas and the
    # over-read channels only affect their own (discarded) depthwise outputs.
    # TODO(synk): add H-tiling with a (k-1)-row halo for very large H*W (tc bottoms out at 1).
    grid = (pl.cdiv(NC, tc),)

    kernel = functools.partial(
        _pseudomax_kernel, mode=mode, alpha=float(alpha), k=k, stride=stride,
        pad=int(padding), eps=1e-8, Hk=Hk, Wo=Wo)

    out = pl.pallas_call(
        kernel,
        out_shape=jax.ShapeDtypeStruct((NC, Hk, Wo), x.dtype),
        grid=grid,
        in_specs=[pl.BlockSpec((tc, H, W), lambda i: (i, 0, 0))],
        out_specs=pl.BlockSpec((tc, Hk, Wo), lambda i: (i, 0, 0)),
        scratch_shapes=[pltpu.VMEM((planes * tc, Hs, W), jnp.float32)],
        compiler_params=pltpu.CompilerParams(
            dimension_semantics=("parallel",),
            vmem_limit_bytes=min(int(cap * 0.5), 96 * 1024 * 1024)),
    )(xr)

    out = out.reshape(N, C, Hk, Wo)
    if stride > 1:
        # TODO(synk): fold the H stride in-kernel too (e.g. an H-direction band matmul);
        # the W stride is already folded, so this is only a small row-subsample of the output.
        out = out[:, :, ::stride, :]
    return out


def _reference(x, mode, alpha, kernel_size, stride, padding):
    """Pure-JAX reference mirroring the PyTorch forward (for the sanity check)."""
    k = kernel_size
    p = (k - 1) // 2
    start = p - padding
    N, C, H, W = x.shape
    Hc, Wc = H + 2 * p - k + 1, W + 2 * p - k + 1

    def box(a):
        ap = jnp.pad(a, ((0, 0), (0, 0), (p, p), (p, p)))
        acc = jnp.zeros((N, C, Hc, Wc), a.dtype)
        for di in range(k):
            for dj in range(k):
                acc = acc + ap[:, :, di:di + Hc, dj:dj + Wc]
        return acc

    e = jnp.exp(alpha * x)
    if mode == 'alpha-softmax':
        pmax = box(x * e) / (box(e) + 1e-8)
    else:
        pmax = (jnp.log(box(e)) - 2 * math.log(float(k))) / alpha
    return pmax[:, :, start::stride, start::stride]


if __name__ == "__main__":
    key = jax.random.PRNGKey(0)
    # small shapes consistent with the module: batch=2, channels=4, spatial=16
    x = jax.random.normal(key, (2, 4, 16, 16), dtype=jnp.float32)

    # default config: alpha-softmax, alpha=4.0, k=3, stride=1, padding=0
    # -> start = 1, so the forward returns (2, 4, 15, 15)
    out = jax.block_until_ready(
        pseudomax_pooling_2d(x, mode='alpha-softmax', alpha=4.0,
                             kernel_size=3, stride=1, padding=0))
    ref = _reference(x, 'alpha-softmax', 4.0, 3, 1, 0)
    assert out.shape == ref.shape == (2, 4, 15, 15), (out.shape, ref.shape)
    assert jnp.allclose(out, ref, atol=1e-3, rtol=1e-3)

    # quasimax branch with stride=2, padding=1 -> start = 0, output (2, 4, 8, 8)
    out2 = jax.block_until_ready(
        pseudomax_pooling_2d(x, mode='alpha-quasimax', alpha=4.0,
                             kernel_size=3, stride=2, padding=1))
    ref2 = _reference(x, 'alpha-quasimax', 4.0, 3, 2, 1)
    assert out2.shape == ref2.shape == (2, 4, 8, 8), (out2.shape, ref2.shape)
    assert jnp.allclose(out2, ref2, atol=1e-3, rtol=1e-3)

    print("KERNEL_OK")
</pallas_src>

<mosaic_0001>
module attributes {stable_mosaic.version = 11 : i64} {
  func.func @_pseudomax_kernel(%arg0: i32, %arg1: memref<8x16x16xf32, #tpu.memory_space<vmem>>, %arg2: memref<8x15x15xf32, #tpu.memory_space<vmem>>, %arg3: memref<16x18x16xf32, #tpu.memory_space<vmem>>) attributes {dimension_semantics = [#tpu.dimension_semantics<parallel>], iteration_bounds = array<i64: 1>, scalar_prefetch = 0 : i64, scratch_operands = 1 : i64, tpu.core_type = #tpu.core_type<tc>, window_params = [{transform_indices = @transform_0, window_bounds = array<i64: 8, 16, 16>}, {transform_indices = @transform_1, window_bounds = array<i64: 8, 15, 15>}]} {
    %c0 = arith.constant 0 : index
    %c0_0 = arith.constant 0 : index
    %c0_1 = arith.constant 0 : index
    %0 = vector.load %arg1[%c0, %c0_0, %c0_1] : memref<8x16x16xf32, #tpu.memory_space<vmem>>, vector<8x16x16xf32>
    %cst = arith.constant 4.000000e+00 : f32
    %1 = vector.broadcast %cst : f32 to vector<8x16x16xf32>
    %2 = arith.mulf %1, %0 : vector<8x16x16xf32>
    %3 = math.exp %2 : vector<8x16x16xf32>
    %cst_2 = arith.constant 0.000000e+00 : f32
    %4 = vector.broadcast %cst_2 : f32 to vector<16x2x16xf32>
    %c0_3 = arith.constant 0 : index
    %c16 = arith.constant 16 : index
    %c0_4 = arith.constant 0 : index
    %5 = vector.load %arg3[%c0_3, %c16, %c0_4] : memref<16x18x16xf32, #tpu.memory_space<vmem>>, vector<16x2x16xf32>
    tpu.vector_store %arg3[%c0_3, %c16, %c0_4], %4 {strides = array<i32>} : memref<16x18x16xf32, #tpu.memory_space<vmem>>, vector<16x2x16xf32>,
    %c0_5 = arith.constant 0 : index
    %c0_6 = arith.constant 0 : index
    %c0_7 = arith.constant 0 : index
    %6 = vector.load %arg3[%c0_5, %c0_6, %c0_7] : memref<16x18x16xf32, #tpu.memory_space<vmem>>, vector<8x16x16xf32>
    tpu.vector_store %arg3[%c0_5, %c0_6, %c0_7], %3 {strides = array<i32>} : memref<16x18x16xf32, #tpu.memory_space<vmem>>, vector<8x16x16xf32>,
    %7 = arith.mulf %0, %3 : vector<8x16x16xf32>
    %c8 = arith.constant 8 : index
    %c0_8 = arith.constant 0 : index
    %c0_9 = arith.constant 0 : index
    %8 = vector.load %arg3[%c8, %c0_8, %c0_9] : memref<16x18x16xf32, #tpu.memory_space<vmem>>, vector<8x16x16xf32>
    tpu.vector_store %arg3[%c8, %c0_8, %c0_9], %7 {strides = array<i32>} : memref<16x18x16xf32, #tpu.memory_space<vmem>>, vector<8x16x16xf32>,
    %c0_10 = arith.constant 0 : index
    %c0_11 = arith.constant 0 : index
    %c0_12 = arith.constant 0 : index
    %9 = vector.load %arg3[%c0_10, %c0_11, %c0_12] : memref<16x18x16xf32, #tpu.memory_space<vmem>>, vector<16x16x16xf32>
    %c0_13 = arith.constant 0 : index
    %c1 = arith.constant 1 : index
    %c0_14 = arith.constant 0 : index
    %10 = vector.load %arg3[%c0_13, %c1, %c0_14] : memref<16x18x16xf32, #tpu.memory_space<vmem>>, vector<16x16x16xf32>
    %11 = arith.addf %9, %10 : vector<16x16x16xf32>
    %c0_15 = arith.constant 0 : index
    %c2 = arith.constant 2 : index
    %c0_16 = arith.constant 0 : index
    %12 = vector.load %arg3[%c0_15, %c2, %c0_16] : memref<16x18x16xf32, #tpu.memory_space<vmem>>, vector<16x16x16xf32>
    %13 = arith.addf %11, %12 : vector<16x16x16xf32>
    %14 = tpu.iota {dimensions = array<i32: 0>} : vector<16x15xi32>
    %15 = tpu.iota {dimensions = array<i32: 1>} : vector<16x15xi32>
    %c1_i32 = arith.constant 1 : i32
    %16 = vector.broadcast %c1_i32 : i32 to vector<16x15xi32>
    %17 = arith.muli %15, %16 : vector<16x15xi32>
    %c0_i32 = arith.constant 0 : i32
    %18 = vector.broadcast %c0_i32 : i32 to vector<16x15xi32>
    %19 = arith.subi %17, %18 : vector<16x15xi32>
    %20 = arith.cmpi sge, %14, %19 : vector<16x15xi32>
    %c3_i32 = arith.constant 3 : i32
    %21 = vector.broadcast %c3_i32 : i32 to vector<16x15xi32>
    %22 = arith.addi %19, %21 : vector<16x15xi32>
    %23 = arith.cmpi slt, %14, %22 : vector<16x15xi32>
    %24 = arith.andi %20, %23 : vector<16x15xi1>
    %25 = arith.extui %24 : vector<16x15xi1> to vector<16x15xi32>
    %26 = arith.sitofp %25 : vector<16x15xi32> to vector<16x15xf32>
    %27 = vector.shape_cast %13 : vector<16x16x16xf32> to vector<256x16xf32>
    %cst_17 = arith.constant dense<0.000000e+00> : vector<256x15xf32>
    %28 = tpu.matmul %27, %26, %cst_17 {dimension_numbers = #tpu.dot_dimension_numbers<[1], [0], [0], [1], [0, 0, 1, 1], [], []>, precision = #tpu.contract_precision<fp32>} : vector<256x16xf32>, vector<16x15xf32>, vector<256x15xf32> -> vector<256x15xf32>
    %29 = vector.shape_cast %28 : vector<256x15xf32> to vector<16x16x15xf32>
    %30 = vector.extract_strided_slice %29 {offsets = [0, 0, 0], sizes = [8, 15, 15], strides = [1, 1, 1]} : vector<16x16x15xf32> to vector<8x15x15xf32>
    %cst_18 = arith.constant 9.99999993E-9 : f32
    %31 = vector.broadcast %cst_18 : f32 to vector<8x15x15xf32>
    %32 = arith.addf %30, %31 : vector<8x15x15xf32>
    %33 = vector.extract_strided_slice %29 {offsets = [8, 0, 0], sizes = [8, 15, 15], strides = [1, 1, 1]} : vector<16x16x15xf32> to vector<8x15x15xf32>
    %34 = tpu.reciprocal %32 {approx = true} : vector<8x15x15xf32> -> vector<8x15x15xf32>
    %35 = arith.mulf %32, %34 : vector<8x15x15xf32>
    %cst_19 = arith.constant 2.000000e+00 : f32
    %36 = vector.broadcast %cst_19 : f32 to vector<8x15x15xf32>
    %37 = arith.subf %36, %35 : vector<8x15x15xf32>
    %38 = arith.mulf %34, %37 : vector<8x15x15xf32>
    %39 = arith.mulf %33, %38 : vector<8x15x15xf32>
    %c0_20 = arith.constant 0 : index
    %c0_21 = arith.constant 0 : index
    %c0_22 = arith.constant 0 : index
    %40 = vector.load %arg2[%c0_20, %c0_21, %c0_22] : memref<8x15x15xf32, #tpu.memory_space<vmem>>, vector<8x15x15xf32>
    tpu.vector_store %arg2[%c0_20, %c0_21, %c0_22], %39 {strides = array<i32>} : memref<8x15x15xf32, #tpu.memory_space<vmem>>, vector<8x15x15xf32>,
    return
  }
  func.func @transform_0(%arg0: i32) -> (i32, i32, i32) {
    %c0_i32 = arith.constant 0 : i32
    %c0_i32_0 = arith.constant 0 : i32
    %c0_i32_1 = arith.constant 0 : i32
    return %arg0, %c0_i32, %c0_i32_0 : i32, i32, i32
  }
  func.func @transform_1(%arg0: i32) -> (i32, i32, i32) {
    %c0_i32 = arith.constant 0 : i32
    %c0_i32_0 = arith.constant 0 : i32
    %c0_i32_1 = arith.constant 0 : i32
    return %arg0, %c0_i32, %c0_i32_0 : i32, i32, i32
  }
}

</mosaic_0001>

<llo_original>
// kernel: tpu_custom_call.1
$region0: #{tpu_custom_call.1}
  #allocation0 [shape = 'u32[]', space=smem, size = 0x4, offset = 0x4, fixed_abs, tag = 'smem constant byte address 0x4 - core index']
  #allocation1 [shape = 'u32[144,128]{1,0:T(1,128)}', space=vmem, size = 0x12000, scoped, tag = 'internal scratch']
  #allocation2 [shape = 'f32[16,18,16]{2,1,0:T(8,128)}', space=vmem, size = 0x30000, scoped, tag = 'scratch operand']
  %s0 = inlined_call_operand.hbm [shape: f32[8,16,16], index: 0, kind: input, shape index: {}]
  %s1 = inlined_call_operand.vmem [shape: f32[8,15,15], index: 1, kind: output, shape index: {}]
  %s2 = sld [smem:[#allocation0]]
  $region18: #{tpu_custom_call.1} parent=0
    _
  %s4 = ssub.s32 1, %s2
  %s5 = scalar_select 0, %s4, %s2
  $region1: #{tpu_custom_call.1} parent=0
    #allocation3 [shape = 'u8[65536]{0}', space=vmem, size = 0x10000, scoped, tag = 'input window, operand 0, single buffered']
    #allocation4 [shape = 's32[1]{0}', space=sflag, size = 0x4, scoped, tag = 'scoped memory for tpu_custom_call.1']
    %6 = vsyncpa [#allocation4], 0
    // Predicated region
    $region2: #{tpu_custom_call.1} parent=1 // pred_check
      _
    $region3: #{tpu_custom_call.1} parent=1 // pred_check_branch
      %8 = sbr.rel (0) target = $region5
    $region4: #{tpu_custom_call.1} parent=1 // pred_region
      %s10 = ssub.s32 2048, 2048
      %11 = vsyncadd [#allocation4], %s10
      %s12 = sshll.u32 [#allocation3], 4
      %s13 = int_to_ptr.vmem [resolvable:$true] %s12
      %18 = dma.hbm_to_vmem [thread:$0]  %s0, 2048, %s13, [#allocation4], 128, 128, 8
    $region5: #{tpu_custom_call.1} parent=1 // pred_fallthru
      _
    // Predicated region
    $region6: #{tpu_custom_call.1} parent=1 // pred_check
      _
    $region7: #{tpu_custom_call.1} parent=1 // pred_check_branch
      %20 = sbr.rel (0) target = $region9
    $region8: #{tpu_custom_call.1} parent=1 // pred_region
      %21 = dma.done [#allocation4], 2048
    $region9: #{tpu_custom_call.1} parent=1 // pred_fallthru
      _
    %v22 = vld [vmem:[#allocation3] sm:$0xff]
    %v23 = vld [vmem:[#allocation3 + $0x8] sm:$0xff]
    %v24 = vld [vmem:[#allocation3 + $0x10] sm:$0xff]
    %v25 = vld [vmem:[#allocation3 + $0x18] sm:$0xff]
    %v26 = vld [vmem:[#allocation3 + $0x20] sm:$0xff]
    %v27 = vld [vmem:[#allocation3 + $0x28] sm:$0xff]
    %v28 = vld [vmem:[#allocation3 + $0x30] sm:$0xff]
    %v29 = vld [vmem:[#allocation3 + $0x38] sm:$0xff]
    %v30 = vld [vmem:[#allocation3 + $0x40] sm:$0xff]
    %v31 = vld [vmem:[#allocation3 + $0x48] sm:$0xff]
    %v32 = vld [vmem:[#allocation3 + $0x50] sm:$0xff]
    %v33 = vld [vmem:[#allocation3 + $0x58] sm:$0xff]
    %v34 = vld [vmem:[#allocation3 + $0x60] sm:$0xff]
    %v35 = vld [vmem:[#allocation3 + $0x68] sm:$0xff]
    %v36 = vld [vmem:[#allocation3 + $0x70] sm:$0xff]
    %v37 = vld [vmem:[#allocation3 + $0x78] sm:$0xff]
    %v38 = vmul.f32 %v22, 4.0
    %v39 = vmul.f32 %v23, 4.0
    %v40 = vmul.f32 %v24, 4.0
    %v41 = vmul.f32 %v25, 4.0
    %v42 = vmul.f32 %v26, 4.0
    %v43 = vmul.f32 %v27, 4.0
    %v44 = vmul.f32 %v28, 4.0
    %v45 = vmul.f32 %v29, 4.0
    %v46 = vmul.f32 %v30, 4.0
    %v47 = vmul.f32 %v31, 4.0
    %v48 = vmul.f32 %v32, 4.0
    %v49 = vmul.f32 %v33, 4.0
    %v50 = vmul.f32 %v34, 4.0
    %v51 = vmul.f32 %v35, 4.0
    %v52 = vmul.f32 %v36, 4.0
    %v53 = vmul.f32 %v37, 4.0
    %v54 = vmul.f32 %v38, 1.442695
    %v55 = vpow.pop %v54
    %v56 = vmul.f32 %v39, 1.442695
    %v57 = vpow.pop %v56
    %v58 = vmul.f32 %v40, 1.442695
    %v59 = vpow.pop %v58
    %v60 = vmul.f32 %v41, 1.442695
    %v61 = vpow.pop %v60
    %v62 = vmul.f32 %v42, 1.442695
    %v63 = vpow.pop %v62
    %v64 = vmul.f32 %v43, 1.442695
    %v65 = vpow.pop %v64
    %v66 = vmul.f32 %v44, 1.442695
    %v67 = vpow.pop %v66
    %v68 = vmul.f32 %v45, 1.442695
    %v69 = vpow.pop %v68
    %v70 = vmul.f32 %v46, 1.442695
    %v71 = vpow.pop %v70
    %v72 = vmul.f32 %v47, 1.442695
    %v73 = vpow.pop %v72
    %v74 = vmul.f32 %v48, 1.442695
    %v75 = vpow.pop %v74
    %v76 = vmul.f32 %v49, 1.442695
    %v77 = vpow.pop %v76
    %v78 = vmul.f32 %v50, 1.442695
    %v79 = vpow.pop %v78
    %v80 = vmul.f32 %v51, 1.442695
    %v81 = vpow.pop %v80
    %v82 = vmul.f32 %v52, 1.442695
    %v83 = vpow.pop %v82
    %v84 = vmul.f32 %v53, 1.442695
    %v85 = vpow.pop %v84
    %vm86 = vcmask 123904
    %87 = vst.msk [vmem:[#allocation2 + $0x10] sm:$0x3] %vm86, 0.0
    %88 = vst.msk [vmem:[#allocation2 + $0x28] sm:$0x3] %vm86, 0.0
    %89 = vst.msk [vmem:[#allocation2 + $0x40] sm:$0x3] %vm86, 0.0
    %90 = vst.msk [vmem:[#allocation2 + $0x58] sm:$0x3] %vm86, 0.0
    %91 = vst.msk [vmem:[#allocation2 + $0x70] sm:$0x3] %vm86, 0.0
    %92 = vst.msk [vmem:[#allocation2 + $0x88] sm:$0x3] %vm86, 0.0
    %93 = vst.msk [vmem:[#allocation2 + $0xa0] sm:$0x3] %vm86, 0.0
    %94 = vst.msk [vmem:[#allocation2 + $0xb8] sm:$0x3] %vm86, 0.0
    %95 = vst.msk [vmem:[#allocation2 + $0xd0] sm:$0x3] %vm86, 0.0
    %96 = vst.msk [vmem:[#allocation2 + $0xe8] sm:$0x3] %vm86, 0.0
    %97 = vst.msk [vmem:[#allocation2 + $0x100] sm:$0x3] %vm86, 0.0
    %98 = vst.msk [vmem:[#allocation2 + $0x118] sm:$0x3] %vm86, 0.0
    %99 = vst.msk [vmem:[#allocation2 + $0x130] sm:$0x3] %vm86, 0.0
    %100 = vst.msk [vmem:[#allocation2 + $0x148] sm:$0x3] %vm86, 0.0
    %101 = vst.msk [vmem:[#allocation2 + $0x160] sm:$0x3] %vm86, 0.0
    %102 = vst.msk [vmem:[#allocation2 + $0x178] sm:$0x3] %vm86, 0.0
    %vm103 = vcmask 130048
    %104 = vst.msk [vmem:[#allocation2] sm:$0xff] %vm103, %v55
    %105 = vst.msk [vmem:[#allocation2 + $0x8] sm:$0xff] %vm103, %v57
    %106 = vst.msk [vmem:[#allocation2 + $0x18] sm:$0xff] %vm103, %v59
    %107 = vst.msk [vmem:[#allocation2 + $0x20] sm:$0xff] %vm103, %v61
    %108 = vst.msk [vmem:[#allocation2 + $0x30] sm:$0xff] %vm103, %v63
    %109 = vst.msk [vmem:[#allocation2 + $0x38] sm:$0xff] %vm103, %v65
    %110 = vst.msk [vmem:[#allocation2 + $0x48] sm:$0xff] %vm103, %v67
    %111 = vst.msk [vmem:[#allocation2 + $0x50] sm:$0xff] %vm103, %v69
    %112 = vst.msk [vmem:[#allocation2 + $0x60] sm:$0xff] %vm103, %v71
    %113 = vst.msk [vmem:[#allocation2 + $0x68] sm:$0xff] %vm103, %v73
    %114 = vst.msk [vmem:[#allocation2 + $0x78] sm:$0xff] %vm103, %v75
    %115 = vst.msk [vmem:[#allocation2 + $0x80] sm:$0xff] %vm103, %v77
    %116 = vst.msk [vmem:[#allocation2 + $0x90] sm:$0xff] %vm103, %v79
    %117 = vst.msk [vmem:[#allocation2 + $0x98] sm:$0xff] %vm103, %v81
    %118 = vst.msk [vmem:[#allocation2 + $0xa8] sm:$0xff] %vm103, %v83
    %119 = vst.msk [vmem:[#allocation2 + $0xb0] sm:$0xff] %vm103, %v85
    %v120 = vmul.f32 %v22, %v55
    %v121 = vmul.f32 %v23, %v57
    %v122 = vmul.f32 %v24, %v59
    %v123 = vmul.f32 %v25, %v61
    %v124 = vmul.f32 %v26, %v63
    %v125 = vmul.f32 %v27, %v65
    %v126 = vmul.f32 %v28, %v67
    %v127 = vmul.f32 %v29, %v69
    %v128 = vmul.f32 %v30, %v71
    %v129 = vmul.f32 %v31, %v73
    %v130 = vmul.f32 %v32, %v75
    %v131 = vmul.f32 %v33, %v77
    %v132 = vmul.f32 %v34, %v79
    %v133 = vmul.f32 %v35, %v81
    %v134 = vmul.f32 %v36, %v83
    %v135 = vmul.f32 %v37, %v85
    %s136 = scalar_lea.vmem [#allocation2], 192
    %137 = vst.msk [vmem:[%s136] sm:$0xff] %vm103, %v120
    %138 = vst.msk [vmem:[%s136 + $0x8] sm:$0xff] %vm103, %v121
    %139 = vst.msk [vmem:[%s136 + $0x18] sm:$0xff] %vm103, %v122
    %140 = vst.msk [vmem:[%s136 + $0x20] sm:$0xff] %vm103, %v123
    %141 = vst.msk [vmem:[%s136 + $0x30] sm:$0xff] %vm103, %v124
    %142 = vst.msk [vmem:[%s136 + $0x38] sm:$0xff] %vm103, %v125
    %143 = vst.msk [vmem:[%s136 + $0x48] sm:$0xff] %vm103, %v126
    %144 = vst.msk [vmem:[%s136 + $0x50] sm:$0xff] %vm103, %v127
    %145 = vst.msk [vmem:[%s136 + $0x60] sm:$0xff] %vm103, %v128
    %146 = vst.msk [vmem:[%s136 + $0x68] sm:$0xff] %vm103, %v129
    %147 = vst.msk [vmem:[%s136 + $0x78] sm:$0xff] %vm103, %v130
    %148 = vst.msk [vmem:[%s136 + $0x80] sm:$0xff] %vm103, %v131
    %149 = vst.msk [vmem:[%s136 + $0x90] sm:$0xff] %vm103, %v132
    %150 = vst.msk [vmem:[%s136 + $0x98] sm:$0xff] %vm103, %v133
    %151 = vst.msk [vmem:[%s136 + $0xa8] sm:$0xff] %vm103, %v134
    %152 = vst.msk [vmem:[%s136 + $0xb0] sm:$0xff] %vm103, %v135
    %v153 = vld [vmem:[#allocation2] sm:$0xff]
    %v154 = vld [vmem:[#allocation2 + $0x8] sm:$0xff]
    %v155 = vld [vmem:[#allocation2 + $0x18] sm:$0xff]
    %v156 = vld [vmem:[#allocation2 + $0x20] sm:$0xff]
    %v157 = vld [vmem:[#allocation2 + $0x30] sm:$0xff]
    %v158 = vld [vmem:[#allocation2 + $0x38] sm:$0xff]
    %v159 = vld [vmem:[#allocation2 + $0x48] sm:$0xff]
    %v160 = vld [vmem:[#allocation2 + $0x50] sm:$0xff]
    %v161 = vld [vmem:[#allocation2 + $0x60] sm:$0xff]
    %v162 = vld [vmem:[#allocation2 + $0x68] sm:$0xff]
    %v163 = vld [vmem:[#allocation2 + $0x78] sm:$0xff]
    %v164 = vld [vmem:[#allocation2 + $0x80] sm:$0xff]
    %v165 = vld [vmem:[#allocation2 + $0x90] sm:$0xff]
    %v166 = vld [vmem:[#allocation2 + $0x98] sm:$0xff]
    %v167 = vld [vmem:[#allocation2 + $0xa8] sm:$0xff]
    %v168 = vld [vmem:[#allocation2 + $0xb0] sm:$0xff]
    %v169 = vld [vmem:[#allocation2 + $0xc0] sm:$0xff]
    %v170 = vld [vmem:[#allocation2 + $0xc8] sm:$0xff]
    %v171 = vld [vmem:[#allocation2 + $0xd8] sm:$0xff]
    %v172 = vld [vmem:[#allocation2 + $0xe0] sm:$0xff]
    %v173 = vld [vmem:[#allocation2 + $0xf0] sm:$0xff]
    %v174 = vld [vmem:[#allocation2 + $0xf8] sm:$0xff]
    %v175 = vld [vmem:[#allocation2 + $0x108] sm:$0xff]
    %v176 = vld [vmem:[#allocation2 + $0x110] sm:$0xff]
    %v177 = vld [vmem:[#allocation2 + $0x120] sm:$0xff]
    %v178 = vld [vmem:[#allocation2 + $0x128] sm:$0xff]
    %v179 = vld [vmem:[#allocation2 + $0x138] sm:$0xff]
    %v180 = vld [vmem:[#allocation2 + $0x140] sm:$0xff]
    %v181 = vld [vmem:[#allocation2 + $0x150] sm:$0xff]
    %v182 = vld [vmem:[#allocation2 + $0x158] sm:$0xff]
    %v183 = vld [vmem:[#allocation2 + $0x168] sm:$0xff]
    %v184 = vld [vmem:[#allocation2 + $0x170] sm:$0xff]
    %v185 = vld [vmem:[#allocation2 + $0x1] sm:$0xff]
    %v186 = vld [vmem:[#allocation2 + $0x9] sm:$0xff]
    %v187 = vld [vmem:[#allocation2 + $0x19] sm:$0xff]
    %v188 = vld [vmem:[#allocation2 + $0x21] sm:$0xff]
    %v189 = vld [vmem:[#allocation2 + $0x31] sm:$0xff]
    %v190 = vld [vmem:[#allocation2 + $0x39] sm:$0xff]
    %v191 = vld [vmem:[#allocation2 + $0x49] sm:$0xff]
    %v192 = vld [vmem:[#allocation2 + $0x51] sm:$0xff]
    %v193 = vld [vmem:[#allocation2 + $0x61] sm:$0xff]
    %v194 = vld [vmem:[#allocation2 + $0x69] sm:$0xff]
    %v195 = vld [vmem:[#allocation2 + $0x79] sm:$0xff]
    %v196 = vld [vmem:[#allocation2 + $0x81] sm:$0xff]
    %v197 = vld [vmem:[#allocation2 + $0x91] sm:$0xff]
    %v198 = vld [vmem:[#allocation2 + $0x99] sm:$0xff]
    %v199 = vld [vmem:[#allocation2 + $0xa9] sm:$0xff]
    %v200 = vld [vmem:[#allocation2 + $0xb1] sm:$0xff]
    %v201 = vld [vmem:[#allocation2 + $0xc1] sm:$0xff]
    %v202 = vld [vmem:[#allocation2 + $0xc9] sm:$0xff]
    %v203 = vld [vmem:[#allocation2 + $0xd9] sm:$0xff]
    %v204 = vld [vmem:[#allocation2 + $0xe1] sm:$0xff]
    %v205 = vld [vmem:[#allocation2 + $0xf1] sm:$0xff]
    %v206 = vld [vmem:[#allocation2 + $0xf9] sm:$0xff]
    %v207 = vld [vmem:[#allocation2 + $0x109] sm:$0xff]
    %v208 = vld [vmem:[#allocation2 + $0x111] sm:$0xff]
    %v209 = vld [vmem:[#allocation2 + $0x121] sm:$0xff]
    %v210 = vld [vmem:[#allocation2 + $0x129] sm:$0xff]
    %v211 = vld [vmem:[#allocation2 + $0x139] sm:$0xff]
    %v212 = vld [vmem:[#allocation2 + $0x141] sm:$0xff]
    %v213 = vld [vmem:[#allocation2 + $0x151] sm:$0xff]
    %v214 = vld [vmem:[#allocation2 + $0x159] sm:$0xff]
    %v215 = vld [vmem:[#allocation2 + $0x169] sm:$0xff]
    %v216 = vld [vmem:[#allocation2 + $0x171] sm:$0xff]
    %v217 = vadd.f32 %v153, %v185
    %v218 = vadd.f32 %v154, %v186
    %v219 = vadd.f32 %v155, %v187
    %v220 = vadd.f32 %v156, %v188
    %v221 = vadd.f32 %v157, %v189
    %v222 = vadd.f32 %v158, %v190
    %v223 = vadd.f32 %v159, %v191
    %v224 = vadd.f32 %v160, %v192
    %v225 = vadd.f32 %v161, %v193
    %v226 = vadd.f32 %v162, %v194
    %v227 = vadd.f32 %v163, %v195
    %v228 = vadd.f32 %v164, %v196
    %v229 = vadd.f32 %v165, %v197
    %v230 = vadd.f32 %v166, %v198
    %v231 = vadd.f32 %v167, %v199
    %v232 = vadd.f32 %v168, %v200
    %v233 = vadd.f32 %v169, %v201
    %v234 = vadd.f32 %v170, %v202
    %v235 = vadd.f32 %v171, %v203
    %v236 = vadd.f32 %v172, %v204
    %v237 = vadd.f32 %v173, %v205
    %v238 = vadd.f32 %v174, %v206
    %v239 = vadd.f32 %v175, %v207
    %v240 = vadd.f32 %v176, %v208
    %v241 = vadd.f32 %v177, %v209
    %v242 = vadd.f32 %v178, %v210
    %v243 = vadd.f32 %v179, %v211
    %v244 = vadd.f32 %v180, %v212
    %v245 = vadd.f32 %v181, %v213
    %v246 = vadd.f32 %v182, %v214
    %v247 = vadd.f32 %v183, %v215
    %v248 = vadd.f32 %v184, %v216
    %v249 = vld [vmem:[#allocation2 + $0x2] sm:$0xff]
    %v250 = vld [vmem:[#allocation2 + $0xa] sm:$0xff]
    %v251 = vld [vmem:[#allocation2 + $0x1a] sm:$0xff]
    %v252 = vld [vmem:[#allocation2 + $0x22] sm:$0xff]
    %v253 = vld [vmem:[#allocation2 + $0x32] sm:$0xff]
    %v254 = vld [vmem:[#allocation2 + $0x3a] sm:$0xff]
    %v255 = vld [vmem:[#allocation2 + $0x4a] sm:$0xff]
    %v256 = vld [vmem:[#allocation2 + $0x52] sm:$0xff]
    %v257 = vld [vmem:[#allocation2 + $0x62] sm:$0xff]
    %v258 = vld [vmem:[#allocation2 + $0x6a] sm:$0xff]
    %v259 = vld [vmem:[#allocation2 + $0x7a] sm:$0xff]
    %v260 = vld [vmem:[#allocation2 + $0x82] sm:$0xff]
    %v261 = vld [vmem:[#allocation2 + $0x92] sm:$0xff]
    %v262 = vld [vmem:[#allocation2 + $0x9a] sm:$0xff]
    %v263 = vld [vmem:[#allocation2 + $0xaa] sm:$0xff]
    %v264 = vld [vmem:[#allocation2 + $0xb2] sm:$0xff]
    %v265 = vld [vmem:[#allocation2 + $0xc2] sm:$0xff]
    %v266 = vld [vmem:[#allocation2 + $0xca] sm:$0xff]
    %v267 = vld [vmem:[#allocation2 + $0xda] sm:$0xff]
    %v268 = vld [vmem:[#allocation2 + $0xe2] sm:$0xff]
    %v269 = vld [vmem:[#allocation2 + $0xf2] sm:$0xff]
    %v270 = vld [vmem:[#allocation2 + $0xfa] sm:$0xff]
    %v271 = vld [vmem:[#allocation2 + $0x10a] sm:$0xff]
    %v272 = vld [vmem:[#allocation2 + $0x112] sm:$0xff]
    %v273 = vld [vmem:[#allocation2 + $0x122] sm:$0xff]
    %v274 = vld [vmem:[#allocation2 + $0x12a] sm:$0xff]
    %v275 = vld [vmem:[#allocation2 + $0x13a] sm:$0xff]
    %v276 = vld [vmem:[#allocation2 + $0x142] sm:$0xff]
    %v277 = vld [vmem:[#allocation2 + $0x152] sm:$0xff]
    %v278 = vld [vmem:[#allocation2 + $0x15a] sm:$0xff]
    %v279 = vld [vmem:[#allocation2 + $0x16a] sm:$0xff]
    %v280 = vld [vmem:[#allocation2 + $0x172] sm:$0xff]
    %v281 = vadd.f32 %v217, %v249
    %v282 = vadd.f32 %v218, %v250
    %v283 = vadd.f32 %v219, %v251
    %v284 = vadd.f32 %v220, %v252
    %v285 = vadd.f32 %v221, %v253
    %v286 = vadd.f32 %v222, %v254
    %v287 = vadd.f32 %v223, %v255
    %v288 = vadd.f32 %v224, %v256
    %v289 = vadd.f32 %v225, %v257
    %v290 = vadd.f32 %v226, %v258
    %v291 = vadd.f32 %v227, %v259
    %v292 = vadd.f32 %v228, %v260
    %v293 = vadd.f32 %v229, %v261
    %v294 = vadd.f32 %v230, %v262
    %v295 = vadd.f32 %v231, %v263
    %v296 = vadd.f32 %v232, %v264
    %v297 = vadd.f32 %v233, %v265
    %v298 = vadd.f32 %v234, %v266
    %v299 = vadd.f32 %v235, %v267
    %v300 = vadd.f32 %v236, %v268
    %v301 = vadd.f32 %v237, %v269
    %v302 = vadd.f32 %v238, %v270
    %v303 = vadd.f32 %v239, %v271
    %v304 = vadd.f32 %v240, %v272
    %v305 = vadd.f32 %v241, %v273
    %v306 = vadd.f32 %v242, %v274
    %v307 = vadd.f32 %v243, %v275
    %v308 = vadd.f32 %v244, %v276
    %v309 = vadd.f32 %v245, %v277
    %v310 = vadd.f32 %v246, %v278
    %v311 = vadd.f32 %v247, %v279
    %v312 = vadd.f32 %v248, %v280
    %v313 = vlaneseq
    %v314 = vshrl.u32 %v313, 7
    %v315 = vadd.s32 %v314, 8
    %v316 = vlaneseq
    %v317 = vand.u32 %v316, 127
    %vm318 = vcmp.ge.s32.totalorder %v314, %v317
    %vm319 = vcmp.ge.s32.totalorder %v315, %v317
    %v320 = vadd.s32 %v317, 3
    %vm321 = vcmp.lt.s32.totalorder %v314, %v320
    %vm322 = vcmp.lt.s32.totalorder %v315, %v320
    %vm323 = vmand %vm318, %vm321
    %vm324 = vmand %vm319, %vm322
    %v325 = vsel %vm323, 1, 0
    %v326 = vsel %vm324, 1, 0
    %v327 = vcvt.s32.f32 %v325
    %v328 = vcvt.s32.f32 %v326
    %v330 = vsel %vm103, %v281, 0
    %v333 = vsel %vm103, %v282, 0
    %v336 = vsel %vm103, %v283, 0
    %v339 = vsel %vm103, %v284, 0
    %v342 = vsel %vm103, %v285, 0
    %v345 = vsel %vm103, %v286, 0
    %v348 = vsel %vm103, %v287, 0
    %v351 = vsel %vm103, %v288, 0
    %v354 = vsel %vm103, %v289, 0
    %v357 = vsel %vm103, %v290, 0
    %v360 = vsel %vm103, %v291, 0
    %v363 = vsel %vm103, %v292, 0
    %v366 = vsel %vm103, %v293, 0
    %v369 = vsel %vm103, %v294, 0
    %v372 = vsel %vm103, %v295, 0
    %v375 = vsel %vm103, %v296, 0
    %v378 = vsel %vm103, %v297, 0
    %v381 = vsel %vm103, %v298, 0
    %v384 = vsel %vm103, %v299, 0
    %v387 = vsel %vm103, %v300, 0
    %v390 = vsel %vm103, %v301, 0
    %v393 = vsel %vm103, %v302, 0
    %v396 = vsel %vm103, %v303, 0
    %v399 = vsel %vm103, %v304, 0
    %v402 = vsel %vm103, %v305, 0
    %v405 = vsel %vm103, %v306, 0
    %v408 = vsel %vm103, %v307, 0
    %v411 = vsel %vm103, %v308, 0
    %v414 = vsel %vm103, %v309, 0
    %v417 = vsel %vm103, %v310, 0
    %v420 = vsel %vm103, %v311, 0
    %v423 = vsel %vm103, %v312, 0
    %425 = vmatprep.subr.mxu0 0.0
    %v426 = vand.u32 %v327, 4294901760
    %427 = vmatpush1.msra.mxu0 %v426
    %428 = vmatprep.subr.mxu0 0.0
    %v429 = vand.u32 %v328, 4294901760
    %430 = vmatpush1.msra.mxu0 %v429
    %431 = vmatprep.subr.mxu0 0.0
    %432 = vmatpush1.msra.mxu0 0.0
    %433 = vmatprep.subr.mxu0 0.0
    %434 = vmatpush1.msra.mxu0 0.0
    %435 = vmatprep.subr.mxu0 0.0
    %436 = vmatpush1.msra.mxu0 0.0
    %437 = vmatprep.subr.mxu0 0.0
    %438 = vmatpush1.msra.mxu0 0.0
    %439 = vmatprep.subr.mxu0 0.0
    %440 = vmatpush1.msra.mxu0 0.0
    %441 = vmatprep.subr.mxu0 0.0
    %442 = vmatpush1.msra.mxu0 0.0
    %443 = vmatprep.subr.mxu0 0.0
    %444 = vmatpush1.msra.mxu0 0.0
    %445 = vmatprep.subr.mxu0 0.0
    %446 = vmatpush1.msra.mxu0 0.0
    %447 = vmatprep.subr.mxu0 0.0
    %448 = vmatpush1.msra.mxu0 0.0
    %449 = vmatprep.subr.mxu0 0.0
    %450 = vmatpush1.msra.mxu0 0.0
    %451 = vmatprep.subr.mxu0 0.0
    %452 = vmatpush1.msra.mxu0 0.0
    %453 = vmatprep.subr.mxu0 0.0
    %454 = vmatpush1.msra.mxu0 0.0
    %455 = vmatprep.subr.mxu0 0.0
    %456 = vmatpush1.msra.mxu0 0.0
    %457 = vmatprep.subr.mxu0 0.0
    %458 = vmatpush1.msra.mxu0 0.0
    %459 = vmatprep.subr.mxu0 0.0
    %460 = vmatpush1.msra.mxu0 0.0
    %461 = vmatprep.subr.mxu0 0.0
    %462 = vmatpush1.msra.mxu0 0.0
    %463 = vmatprep.subr.mxu0 0.0
    %464 = vmatpush1.msra.mxu0 0.0
    %465 = vmatprep.subr.mxu0 0.0
    %466 = vmatpush1.msra.mxu0 0.0
    %467 = vmatprep.subr.mxu0 0.0
    %468 = vmatpush1.msra.mxu0 0.0
    %469 = vmatprep.subr.mxu0 0.0
    %470 = vmatpush1.msra.mxu0 0.0
    %471 = vmatprep.subr.mxu0 0.0
    %472 = vmatpush1.msra.mxu0 0.0
    %473 = vmatprep.subr.mxu0 0.0
    %474 = vmatpush1.msra.mxu0 0.0
    %475 = vmatprep.subr.mxu0 0.0
    %476 = vmatpush1.msra.mxu0 0.0
    %477 = vmatprep.subr.mxu0 0.0
    %478 = vmatpush1.msra.mxu0 0.0
    %479 = vmatprep.subr.mxu0 0.0
    %480 = vmatpush1.msra.mxu0 0.0
    %481 = vmatprep.subr.mxu0 0.0
    %482 = vmatpush1.msra.mxu0 0.0
    %483 = vmatprep.subr.mxu0 0.0
    %484 = vmatpush1.msra.mxu0 0.0
    %485 = vmatprep.subr.mxu0 0.0
    %486 = vmatpush1.msra.mxu0 0.0
    %487 = vmatprep.subr.mxu0 0.0
    %488 = vmatpush1.msra.mxu0 0.0
    %489 = vmatprep.subr.mxu0 0.0
    %490 = vmatpush1.msra.mxu0 0.0
    %491 = vmatprep.mubr.f32.mxu0 0.0
    %v492 = vand.u32 %v330, 4294901760
    %v493 = vsub.f32 %v330, %v492
    %v494 = vand.u32 %v493, 4294901760
    %v495 = vsub.f32 %v493, %v494
    %v496 = vand.u32 %v495, 4294901760
    %497 = vmatmul.mubr.f32.gmra.mrb[0].mxu0 %v496
    %v498 = vpop.f32.mrb[0].mxu0
    %v499 = vadd.f32 0.0, %v498
    %v500 = vpop.f32.mrb[0].mxu0
    %501 = vmatprep.mubr.f32.mxu0 0.0
    %v502 = vand.u32 %v333, 4294901760
    %v503 = vsub.f32 %v333, %v502
    %v504 = vand.u32 %v503, 4294901760
    %v505 = vsub.f32 %v503, %v504
    %v506 = vand.u32 %v505, 4294901760
    %507 = vmatmul.mubr.f32.gmra.mrb[0].mxu0 %v506
    %v508 = vpop.f32.mrb[0].mxu0
    %v509 = vadd.f32 0.0, %v508
    %v510 = vpop.f32.mrb[0].mxu0
    %511 = vmatprep.mubr.f32.mxu0 0.0
    %v512 = vand.u32 %v336, 4294901760
    %v513 = vsub.f32 %v336, %v512
    %v514 = vand.u32 %v513, 4294901760
    %v515 = vsub.f32 %v513, %v514
    %v516 = vand.u32 %v515, 4294901760
    %517 = vmatmul.mubr.f32.gmra.mrb[0].mxu0 %v516
    %v518 = vpop.f32.mrb[0].mxu0
    %v519 = vadd.f32 0.0, %v518
    %v520 = vpop.f32.mrb[0].mxu0
    %521 = vmatprep.mubr.f32.mxu0 0.0
    %v522 = vand.u32 %v339, 4294901760
    %v523 = vsub.f32 %v339, %v522
    %v524 = vand.u32 %v523, 4294901760
    %v525 = vsub.f32 %v523, %v524
    %v526 = vand.u32 %v525, 4294901760
    %527 = vmatmul.mubr.f32.gmra.mrb[0].mxu0 %v526
    %v528 = vpop.f32.mrb[0].mxu0
    %v529 = vadd.f32 0.0, %v528
    %v530 = vpop.f32.mrb[0].mxu0
    %531 = vmatprep.mubr.f32.mxu0 0.0
    %v532 = vand.u32 %v342, 4294901760
    %v533 = vsub.f32 %v342, %v532
    %v534 = vand.u32 %v533, 4294901760
    %v535 = vsub.f32 %v533, %v534
    %v536 = vand.u32 %v535, 4294901760
    %537 = vmatmul.mubr.f32.gmra.mrb[0].mxu0 %v536
    %v538 = vpop.f32.mrb[0].mxu0
    %v539 = vadd.f32 0.0, %v538
    %v540 = vpop.f32.mrb[0].mxu0
    %541 = vmatprep.mubr.f32.mxu0 0.0
    %v542 = vand.u32 %v345, 4294901760
    %v543 = vsub.f32 %v345, %v542
    %v544 = vand.u32 %v543, 4294901760
    %v545 = vsub.f32 %v543, %v544
    %v546 = vand.u32 %v545, 4294901760
    %547 = vmatmul.mubr.f32.gmra.mrb[0].mxu0 %v546
    %v548 = vpop.f32.mrb[0].mxu0
    %v549 = vadd.f32 0.0, %v548
    %v550 = vpop.f32.mrb[0].mxu0
    %551 = vmatprep.mubr.f32.mxu0 0.0
    %v552 = vand.u32 %v348, 4294901760
    %v553 = vsub.f32 %v348, %v552
    %v554 = vand.u32 %v553, 4294901760
    %v555 = vsub.f32 %v553, %v554
    %v556 = vand.u32 %v555, 4294901760
    %557 = vmatmul.mubr.f32.gmra.mrb[0].mxu0 %v556
    %v558 = vpop.f32.mrb[0].mxu0
    %v559 = vadd.f32 0.0, %v558
    %v560 = vpop.f32.mrb[0].mxu0
    %561 = vmatprep.mubr.f32.mxu0 0.0
    %v562 = vand.u32 %v351, 4294901760
    %v563 = vsub.f32 %v351, %v562
    %v564 = vand.u32 %v563, 4294901760
    %v565 = vsub.f32 %v563, %v564
    %v566 = vand.u32 %v565, 4294901760
    %567 = vmatmul.mubr.f32.gmra.mrb[0].mxu0 %v566
    %v568 = vpop.f32.mrb[0].mxu0
    %v569 = vadd.f32 0.0, %v568
    %v570 = vpop.f32.mrb[0].mxu0
    %571 = vmatprep.mubr.f32.mxu0 0.0
    %v572 = vand.u32 %v354, 4294901760
    %v573 = vsub.f32 %v354, %v572
    %v574 = vand.u32 %v573, 4294901760
    %v575 = vsub.f32 %v573, %v574
    %v576 = vand.u32 %v575, 4294901760
    %577 = vmatmul.mubr.f32.gmra.mrb[0].mxu0 %v576
    %v578 = vpop.f32.mrb[0].mxu0
    %v579 = vadd.f32 0.0, %v578
    %v580 = vpop.f32.mrb[0].mxu0
    %581 = vmatprep.mubr.f32.mxu0 0.0
    %v582 = vand.u32 %v357, 4294901760
    %v583 = vsub.f32 %v357, %v582
    %v584 = vand.u32 %v583, 4294901760
    %v585 = vsub.f32 %v583, %v584
    %v586 = vand.u32 %v585, 4294901760
    %587 = vmatmul.mubr.f32.gmra.mrb[0].mxu0 %v586
    %v588 = vpop.f32.mrb[0].mxu0
    %v589 = vadd.f32 0.0, %v588
    %v590 = vpop.f32.mrb[0].mxu0
    %591 = vmatprep.mubr.f32.mxu0 0.0
    %v592 = vand.u32 %v360, 4294901760
    %v593 = vsub.f32 %v360, %v592
    %v594 = vand.u32 %v593, 4294901760
    %v595 = vsub.f32 %v593, %v594
    %v596 = vand.u32 %v595, 4294901760
    %597 = vmatmul.mubr.f32.gmra.mrb[0].mxu0 %v596
    %v598 = vpop.f32.mrb[0].mxu0
    %v599 = vadd.f32 0.0, %v598
    %v600 = vpop.f32.mrb[0].mxu0
    %601 = vmatprep.mubr.f32.mxu0 0.0
    %v602 = vand.u32 %v363, 4294901760
    %v603 = vsub.f32 %v363, %v602
    %v604 = vand.u32 %v603, 4294901760
    %v605 = vsub.f32 %v603, %v604
    %v606 = vand.u32 %v605, 4294901760
    %607 = vmatmul.mubr.f32.gmra.mrb[0].mxu0 %v606
    %v608 = vpop.f32.mrb[0].mxu0
    %v609 = vadd.f32 0.0, %v608
    %v610 = vpop.f32.mrb[0].mxu0
    %611 = vmatprep.mubr.f32.mxu0 0.0
    %v612 = vand.u32 %v366, 4294901760
    %v613 = vsub.f32 %v366, %v612
    %v614 = vand.u32 %v613, 4294901760
    %v615 = vsub.f32 %v613, %v614
    %v616 = vand.u32 %v615, 4294901760
    %617 = vmatmul.mubr.f32.gmra.mrb[0].mxu0 %v616
    %v618 = vpop.f32.mrb[0].mxu0
    %v619 = vadd.f32 0.0, %v618
    %v620 = vpop.f32.mrb[0].mxu0
    %621 = vmatprep.mubr.f32.mxu0 0.0
    %v622 = vand.u32 %v369, 4294901760
    %v623 = vsub.f32 %v369, %v622
    %v624 = vand.u32 %v623, 4294901760
    %v625 = vsub.f32 %v623, %v624
    %v626 = vand.u32 %v625, 4294901760
    %627 = vmatmul.mubr.f32.gmra.mrb[0].mxu0 %v626
    %v628 = vpop.f32.mrb[0].mxu0
    %v629 = vadd.f32 0.0, %v628
    %v630 = vpop.f32.mrb[0].mxu0
    %631 = vmatprep.mubr.f32.mxu0 0.0
    %v632 = vand.u32 %v372, 4294901760
    %v633 = vsub.f32 %v372, %v632
    %v634 = vand.u32 %v633, 4294901760
    %v635 = vsub.f32 %v633, %v634
    %v636 = vand.u32 %v635, 4294901760
    %637 = vmatmul.mubr.f32.gmra.mrb[0].mxu0 %v636
    %v638 = vpop.f32.mrb[0].mxu0
    %v639 = vadd.f32 0.0, %v638
    %v640 = vpop.f32.mrb[0].mxu0
    %641 = vmatprep.mubr.f32.mxu0 0.0
    %v642 = vand.u32 %v375, 4294901760
    %v643 = vsub.f32 %v375, %v642
    %v644 = vand.u32 %v643, 4294901760
    %v645 = vsub.f32 %v643, %v644
    %v646 = vand.u32 %v645, 4294901760
    %647 = vmatmul.mubr.f32.gmra.mrb[0].mxu0 %v646
    %v648 = vpop.f32.mrb[0].mxu0
    %v649 = vadd.f32 0.0, %v648
    %v650 = vpop.f32.mrb[0].mxu0
    %651 = vmatprep.mubr.f32.mxu0 0.0
    %v652 = vand.u32 %v378, 4294901760
    %v653 = vsub.f32 %v378, %v652
    %v654 = vand.u32 %v653, 4294901760
    %v655 = vsub.f32 %v653, %v654
    %v656 = vand.u32 %v655, 4294901760
    %657 = vmatmul.mubr.f32.gmra.mrb[0].mxu0 %v656
    %v658 = vpop.f32.mrb[0].mxu0
    %v659 = vadd.f32 0.0, %v658
    %v660 = vpop.f32.mrb[0].mxu0
    %661 = vmatprep.mubr.f32.mxu0 0.0
    %v662 = vand.u32 %v381, 4294901760
    %v663 = vsub.f32 %v381, %v662
    %v664 = vand.u32 %v663, 4294901760
    %v665 = vsub.f32 %v663, %v664
    %v666 = vand.u32 %v665, 4294901760
    %667 = vmatmul.mubr.f32.gmra.mrb[0].mxu0 %v666
    %v668 = vpop.f32.mrb[0].mxu0
    %v669 = vadd.f32 0.0, %v668
    %v670 = vpop.f32.mrb[0].mxu0
    %671 = vmatprep.mubr.f32.mxu0 0.0
    %v672 = vand.u32 %v384, 4294901760
    %v673 = vsub.f32 %v384, %v672
    %v674 = vand.u32 %v673, 4294901760
    %v675 = vsub.f32 %v673, %v674
    %v676 = vand.u32 %v675, 4294901760
    %677 = vmatmul.mubr.f32.gmra.mrb[0].mxu0 %v676
    %v678 = vpop.f32.mrb[0].mxu0
    %v679 = vadd.f32 0.0, %v678
    %v680 = vpop.f32.mrb[0].mxu0
    %681 = vmatprep.mubr.f32.mxu0 0.0
    %v682 = vand.u32 %v387, 4294901760
    %v683 = vsub.f32 %v387, %v682
    %v684 = vand.u32 %v683, 4294901760
    %v685 = vsub.f32 %v683, %v684
    %v686 = vand.u32 %v685, 4294901760
    %687 = vmatmul.mubr.f32.gmra.mrb[0].mxu0 %v686
    %v688 = vpop.f32.mrb[0].mxu0
    %v689 = vadd.f32 0.0, %v688
    %v690 = vpop.f32.mrb[0].mxu0
    %691 = vmatprep.mubr.f32.mxu0 0.0
    %v692 = vand.u32 %v390, 4294901760
    %v693 = vsub.f32 %v390, %v692
    %v694 = vand.u32 %v693, 4294901760
    %v695 = vsub.f32 %v693, %v694
    %v696 = vand.u32 %v695, 4294901760
    %697 = vmatmul.mubr.f32.gmra.mrb[0].mxu0 %v696
    %v698 = vpop.f32.mrb[0].mxu0
    %v699 = vadd.f32 0.0, %v698
    %v700 = vpop.f32.mrb[0].mxu0
    %701 = vmatprep.mubr.f32.mxu0 0.0
    %v702 = vand.u32 %v393, 4294901760
    %v703 = vsub.f32 %v393, %v702
    %v704 = vand.u32 %v703, 4294901760
    %v705 = vsub.f32 %v703, %v704
    %v706 = vand.u32 %v705, 4294901760
    %707 = vmatmul.mubr.f32.gmra.mrb[0].mxu0 %v706
    %v708 = vpop.f32.mrb[0].mxu0
    %v709 = vadd.f32 0.0, %v708
    %v710 = vpop.f32.mrb[0].mxu0
    %711 = vmatprep.mubr.f32.mxu0 0.0
    %v712 = vand.u32 %v396, 4294901760
    %v713 = vsub.f32 %v396, %v712
    %v714 = vand.u32 %v713, 4294901760
    %v715 = vsub.f32 %v713, %v714
    %v716 = vand.u32 %v715, 4294901760
    %717 = vmatmul.mubr.f32.gmra.mrb[0].mxu0 %v716
    %v718 = vpop.f32.mrb[0].mxu0
    %v719 = vadd.f32 0.0, %v718
    %v720 = vpop.f32.mrb[0].mxu0
    %721 = vmatprep.mubr.f32.mxu0 0.0
    %v722 = vand.u32 %v399, 4294901760
    %v723 = vsub.f32 %v399, %v722
    %v724 = vand.u32 %v723, 4294901760
    %v725 = vsub.f32 %v723, %v724
    %v726 = vand.u32 %v725, 4294901760
    %727 = vmatmul.mubr.f32.gmra.mrb[0].mxu0 %v726
    %v728 = vpop.f32.mrb[0].mxu0
    %v729 = vadd.f32 0.0, %v728
    %v730 = vpop.f32.mrb[0].mxu0
    %731 = vmatprep.mubr.f32.mxu0 0.0
    %v732 = vand.u32 %v402, 4294901760
    %v733 = vsub.f32 %v402, %v732
    %v734 = vand.u32 %v733, 4294901760
    %v735 = vsub.f32 %v733, %v734
    %v736 = vand.u32 %v735, 4294901760
    %737 = vmatmul.mubr.f32.gmra.mrb[0].mxu0 %v736
    %v738 = vpop.f32.mrb[0].mxu0
    %v739 = vadd.f32 0.0, %v738
    %v740 = vpop.f32.mrb[0].mxu0
    %741 = vmatprep.mubr.f32.mxu0 0.0
    %v742 = vand.u32 %v405, 4294901760
    %v743 = vsub.f32 %v405, %v742
    %v744 = vand.u32 %v743, 4294901760
    %v745 = vsub.f32 %v743, %v744
    %v746 = vand.u32 %v745, 4294901760
    %747 = vmatmul.mubr.f32.gmra.mrb[0].mxu0 %v746
    %v748 = vpop.f32.mrb[0].mxu0
    %v749 = vadd.f32 0.0, %v748
    %v750 = vpop.f32.mrb[0].mxu0
    %751 = vmatprep.mubr.f32.mxu0 0.0
    %v752 = vand.u32 %v408, 4294901760
    %v753 = vsub.f32 %v408, %v752
    %v754 = vand.u32 %v753, 4294901760
    %v755 = vsub.f32 %v753, %v754
    %v756 = vand.u32 %v755, 4294901760
    %757 = vmatmul.mubr.f32.gmra.mrb[0].mxu0 %v756
    %v758 = vpop.f32.mrb[0].mxu0
    %v759 = vadd.f32 0.0, %v758
    %v760 = vpop.f32.mrb[0].mxu0
    %761 = vmatprep.mubr.f32.mxu0 0.0
    %v762 = vand.u32 %v411, 4294901760
    %v763 = vsub.f32 %v411, %v762
    %v764 = vand.u32 %v763, 4294901760
    %v765 = vsub.f32 %v763, %v764
    %v766 = vand.u32 %v765, 4294901760
    %767 = vmatmul.mubr.f32.gmra.mrb[0].mxu0 %v766
    %v768 = vpop.f32.mrb[0].mxu0
    %v769 = vadd.f32 0.0, %v768
    %v770 = vpop.f32.mrb[0].mxu0
    %771 = vmatprep.mubr.f32.mxu0 0.0
    %v772 = vand.u32 %v414, 4294901760
    %v773 = vsub.f32 %v414, %v772
    %v774 = vand.u32 %v773, 4294901760
    %v775 = vsub.f32 %v773, %v774
    %v776 = vand.u32 %v775, 4294901760
    %777 = vmatmul.mubr.f32.gmra.mrb[0].mxu0 %v776
    %v778 = vpop.f32.mrb[0].mxu0
    %v779 = vadd.f32 0.0, %v778
    %v780 = vpop.f32.mrb[0].mxu0
    %781 = vmatprep.mubr.f32.mxu0 0.0
    %v782 = vand.u32 %v417, 4294901760
    %v783 = vsub.f32 %v417, %v782
    %v784 = vand.u32 %v783, 4294901760
    %v785 = vsub.f32 %v783, %v784
    %v786 = vand.u32 %v785, 4294901760
    %787 = vmatmul.mubr.f32.gmra.mrb[0].mxu0 %v786
    %v788 = vpop.f32.mrb[0].mxu0
    %v789 = vadd.f32 0.0, %v788
    %v790 = vpop.f32.mrb[0].mxu0
    %791 = vmatprep.mubr.f32.mxu0 0.0
    %v792 = vand.u32 %v420, 4294901760
    %v793 = vsub.f32 %v420, %v792
    %v794 = vand.u32 %v793, 4294901760
    %v795 = vsub.f32 %v793, %v794
    %v796 = vand.u32 %v795, 4294901760
    %797 = vmatmul.mubr.f32.gmra.mrb[0].mxu0 %v796
    %v798 = vpop.f32.mrb[0].mxu0
    %v799 = vadd.f32 0.0, %v798
    %v800 = vpop.f32.mrb[0].mxu0
    %801 = vmatprep.mubr.f32.mxu0 0.0
    %v802 = vand.u32 %v423, 4294901760
    %v803 = vsub.f32 %v423, %v802
    %v804 = vand.u32 %v803, 4294901760
    %v805 = vsub.f32 %v803, %v804
    %v806 = vand.u32 %v805, 4294901760
    %807 = vmatmul.mubr.f32.gmra.mrb[0].mxu0 %v806
    %v808 = vpop.f32.mrb[0].mxu0
    %v809 = vadd.f32 0.0, %v808
    %v810 = vpop.f32.mrb[0].mxu0
    %811 = vdwg.mxu0
    %812 = vmatprep.subr.mxu0 0.0
    %v813 = vand.u32 %v327, 4294901760
    %v814 = vsub.f32 %v327, %v813
    %v815 = vand.u32 %v814, 4294901760
    %v816 = vsub.f32 %v814, %v815
    %v817 = vand.u32 %v816, 4294901760
    %818 = vmatpush1.msra.mxu0 %v817
    %819 = vmatprep.subr.mxu0 0.0
    %v820 = vand.u32 %v328, 4294901760
    %v821 = vsub.f32 %v328, %v820
    %v822 = vand.u32 %v821, 4294901760
    %v823 = vsub.f32 %v821, %v822
    %v824 = vand.u32 %v823, 4294901760
    %825 = vmatpush1.msra.mxu0 %v824
    %826 = vmatprep.subr.mxu0 0.0
    %827 = vmatpush1.msra.mxu0 0.0
    %828 = vmatprep.subr.mxu0 0.0
    %829 = vmatpush1.msra.mxu0 0.0
    %830 = vmatprep.subr.mxu0 0.0
    %831 = vmatpush1.msra.mxu0 0.0
    %832 = vmatprep.subr.mxu0 0.0
    %833 = vmatpush1.msra.mxu0 0.0
    %834 = vmatprep.subr.mxu0 0.0
    %835 = vmatpush1.msra.mxu0 0.0
    %836 = vmatprep.subr.mxu0 0.0
    %837 = vmatpush1.msra.mxu0 0.0
    %838 = vmatprep.subr.mxu0 0.0
    %839 = vmatpush1.msra.mxu0 0.0
    %840 = vmatprep.subr.mxu0 0.0
    %841 = vmatpush1.msra.mxu0 0.0
    %842 = vmatprep.subr.mxu0 0.0
    %843 = vmatpush1.msra.mxu0 0.0
    %844 = vmatprep.subr.mxu0 0.0
    %845 = vmatpush1.msra.mxu0 0.0
    %846 = vmatprep.subr.mxu0 0.0
    %847 = vmatpush1.msra.mxu0 0.0
    %848 = vmatprep.subr.mxu0 0.0
    %849 = vmatpush1.msra.mxu0 0.0
    %850 = vmatprep.subr.mxu0 0.0
    %851 = vmatpush1.msra.mxu0 0.0
    %852 = vmatprep.subr.mxu0 0.0
    %853 = vmatpush1.msra.mxu0 0.0
    %854 = vmatprep.subr.mxu0 0.0
    %855 = vmatpush1.msra.mxu0 0.0
    %856 = vmatprep.subr.mxu0 0.0
    %857 = vmatpush1.msra.mxu0 0.0
    %858 = vmatprep.subr.mxu0 0.0
    %859 = vmatpush1.msra.mxu0 0.0
    %860 = vmatprep.subr.mxu0 0.0
    %861 = vmatpush1.msra.mxu0 0.0
    %862 = vmatprep.subr.mxu0 0.0
    %863 = vmatpush1.msra.mxu0 0.0
    %864 = vmatprep.subr.mxu0 0.0
    %865 = vmatpush1.msra.mxu0 0.0
    %866 = vmatprep.subr.mxu0 0.0
    %867 = vmatpush1.msra.mxu0 0.0
    %868 = vmatprep.subr.mxu0 0.0
    %869 = vmatpush1.msra.mxu0 0.0
    %870 = vmatprep.subr.mxu0 0.0
    %871 = vmatpush1.msra.mxu0 0.0
    %872 = vmatprep.subr.mxu0 0.0
    %873 = vmatpush1.msra.mxu0 0.0
    %874 = vmatprep.subr.mxu0 0.0
    %875 = vmatpush1.msra.mxu0 0.0
    %876 = vmatprep.subr.mxu0 0.0
    %877 = vmatpush1.msra.mxu0 0.0
    %878 = vmatprep.subr.mxu0 0.0
    %879 = vmatpush1.msra.mxu0 0.0
    %880 = vmatprep.subr.mxu0 0.0
    %881 = vmatpush1.msra.mxu0 0.0
    %882 = vmatprep.subr.mxu0 0.0
    %883 = vmatpush1.msra.mxu0 0.0
    %884 = vmatprep.subr.mxu0 0.0
    %885 = vmatpush1.msra.mxu0 0.0
    %886 = vmatprep.mubr.f32.mxu0 0.0
    %v887 = vand.u32 %v330, 4294901760
    %888 = vmatmul.mubr.f32.gmra.mrb[0].mxu0 %v887
    %v889 = vpop.f32.mrb[0].mxu0
    %v890 = vadd.f32 %v499, %v889
    %v891 = vpop.f32.mrb[0].mxu0
    %892 = vmatprep.mubr.f32.mxu0 0.0
    %v893 = vand.u32 %v333, 4294901760
    %894 = vmatmul.mubr.f32.gmra.mrb[0].mxu0 %v893
    %v895 = vpop.f32.mrb[0].mxu0
    %v896 = vadd.f32 %v509, %v895
    %v897 = vpop.f32.mrb[0].mxu0
    %898 = vmatprep.mubr.f32.mxu0 0.0
    %v899 = vand.u32 %v336, 4294901760
    %900 = vmatmul.mubr.f32.gmra.mrb[0].mxu0 %v899
    %v901 = vpop.f32.mrb[0].mxu0
    %v902 = vadd.f32 %v519, %v901
    %v903 = vpop.f32.mrb[0].mxu0
    %904 = vmatprep.mubr.f32.mxu0 0.0
    %v905 = vand.u32 %v339, 4294901760
    %906 = vmatmul.mubr.f32.gmra.mrb[0].mxu0 %v905
    %v907 = vpop.f32.mrb[0].mxu0
    %v908 = vadd.f32 %v529, %v907
    %v909 = vpop.f32.mrb[0].mxu0
    %910 = vmatprep.mubr.f32.mxu0 0.0
    %v911 = vand.u32 %v342, 4294901760
    %912 = vmatmul.mubr.f32.gmra.mrb[0].mxu0 %v911
    %v913 = vpop.f32.mrb[0].mxu0
    %v914 = vadd.f32 %v539, %v913
    %v915 = vpop.f32.mrb[0].mxu0
    %916 = vmatprep.mubr.f32.mxu0 0.0
    %v917 = vand.u32 %v345, 4294901760
    %918 = vmatmul.mubr.f32.gmra.mrb[0].mxu0 %v917
    %v919 = vpop.f32.mrb[0].mxu0
    %v920 = vadd.f32 %v549, %v919
    %v921 = vpop.f32.mrb[0].mxu0
    %922 = vmatprep.mubr.f32.mxu0 0.0
    %v923 = vand.u32 %v348, 4294901760
    %924 = vmatmul.mubr.f32.gmra.mrb[0].mxu0 %v923
    %v925 = vpop.f32.mrb[0].mxu0
    %v926 = vadd.f32 %v559, %v925
    %v927 = vpop.f32.mrb[0].mxu0
    %928 = vmatprep.mubr.f32.mxu0 0.0
    %v929 = vand.u32 %v351, 4294901760
    %930 = vmatmul.mubr.f32.gmra.mrb[0].mxu0 %v929
    %v931 = vpop.f32.mrb[0].mxu0
    %v932 = vadd.f32 %v569, %v931
    %v933 = vpop.f32.mrb[0].mxu0
    %934 = vmatprep.mubr.f32.mxu0 0.0
    %v935 = vand.u32 %v354, 4294901760
    %936 = vmatmul.mubr.f32.gmra.mrb[0].mxu0 %v935
    %v937 = vpop.f32.mrb[0].mxu0
    %v938 = vadd.f32 %v579, %v937
    %v939 = vpop.f32.mrb[0].mxu0
    %940 = vmatprep.mubr.f32.mxu0 0.0
    %v941 = vand.u32 %v357, 4294901760
    %942 = vmatmul.mubr.f32.gmra.mrb[0].mxu0 %v941
    %v943 = vpop.f32.mrb[0].mxu0
    %v944 = vadd.f32 %v589, %v943
    %v945 = vpop.f32.mrb[0].mxu0
    %946 = vmatprep.mubr.f32.mxu0 0.0
    %v947 = vand.u32 %v360, 4294901760
    %948 = vmatmul.mubr.f32.gmra.mrb[0].mxu0 %v947
    %v949 = vpop.f32.mrb[0].mxu0
    %v950 = vadd.f32 %v599, %v949
    %v951 = vpop.f32.mrb[0].mxu0
    %952 = vmatprep.mubr.f32.mxu0 0.0
    %v953 = vand.u32 %v363, 4294901760
    %954 = vmatmul.mubr.f32.gmra.mrb[0].mxu0 %v953
    %v955 = vpop.f32.mrb[0].mxu0
    %v956 = vadd.f32 %v609, %v955
    %v957 = vpop.f32.mrb[0].mxu0
    %958 = vmatprep.mubr.f32.mxu0 0.0
    %v959 = vand.u32 %v366, 4294901760
    %960 = vmatmul.mubr.f32.gmra.mrb[0].mxu0 %v959
    %v961 = vpop.f32.mrb[0].mxu0
    %v962 = vadd.f32 %v619, %v961
    %v963 = vpop.f32.mrb[0].mxu0
    %964 = vmatprep.mubr.f32.mxu0 0.0
    %v965 = vand.u32 %v369, 4294901760
    %966 = vmatmul.mubr.f32.gmra.mrb[0].mxu0 %v965
    %v967 = vpop.f32.mrb[0].mxu0
    %v968 = vadd.f32 %v629, %v967
    %v969 = vpop.f32.mrb[0].mxu0
    %970 = vmatprep.mubr.f32.mxu0 0.0
    %v971 = vand.u32 %v372, 4294901760
    %972 = vmatmul.mubr.f32.gmra.mrb[0].mxu0 %v971
    %v973 = vpop.f32.mrb[0].mxu0
    %v974 = vadd.f32 %v639, %v973
    %v975 = vpop.f32.mrb[0].mxu0
    %976 = vmatprep.mubr.f32.mxu0 0.0
    %v977 = vand.u32 %v375, 4294901760
    %978 = vmatmul.mubr.f32.gmra.mrb[0].mxu0 %v977
    %v979 = vpop.f32.mrb[0].mxu0
    %v980 = vadd.f32 %v649, %v979
    %v981 = vpop.f32.mrb[0].mxu0
    %982 = vmatprep.mubr.f32.mxu0 0.0
    %v983 = vand.u32 %v378, 4294901760
    %984 = vmatmul.mubr.f32.gmra.mrb[0].mxu0 %v983
    %v985 = vpop.f32.mrb[0].mxu0
    %v986 = vadd.f32 %v659, %v985
    %v987 = vpop.f32.mrb[0].mxu0
    %988 = vmatprep.mubr.f32.mxu0 0.0
    %v989 = vand.u32 %v381, 4294901760
    %990 = vmatmul.mubr.f32.gmra.mrb[0].mxu0 %v989
    %v991 = vpop.f32.mrb[0].mxu0
    %v992 = vadd.f32 %v669, %v991
    %v993 = vpop.f32.mrb[0].mxu0
    %994 = vmatprep.mubr.f32.mxu0 0.0
    %v995 = vand.u32 %v384, 4294901760
    %996 = vmatmul.mubr.f32.gmra.mrb[0].mxu0 %v995
    %v997 = vpop.f32.mrb[0].mxu0
    %v998 = vadd.f32 %v679, %v997
    %v999 = vpop.f32.mrb[0].mxu0
    %1000 = vmatprep.mubr.f32.mxu0 0.0
    %v1001 = vand.u32 %v387, 4294901760
    %1002 = vmatmul.mubr.f32.gmra.mrb[0].mxu0 %v1001
    %v1003 = vpop.f32.mrb[0].mxu0
    %v1004 = vadd.f32 %v689, %v1003
    %v1005 = vpop.f32.mrb[0].mxu0
    %1006 = vmatprep.mubr.f32.mxu0 0.0
    %v1007 = vand.u32 %v390, 4294901760
    %1008 = vmatmul.mubr.f32.gmra.mrb[0].mxu0 %v1007
    %v1009 = vpop.f32.mrb[0].mxu0
    %v1010 = vadd.f32 %v699, %v1009
    %v1011 = vpop.f32.mrb[0].mxu0
    %1012 = vmatprep.mubr.f32.mxu0 0.0
    %v1013 = vand.u32 %v393, 4294901760
    %1014 = vmatmul.mubr.f32.gmra.mrb[0].mxu0 %v1013
    %v1015 = vpop.f32.mrb[0].mxu0
    %v1016 = vadd.f32 %v709, %v1015
    %v1017 = vpop.f32.mrb[0].mxu0
    %1018 = vmatprep.mubr.f32.mxu0 0.0
    %v1019 = vand.u32 %v396, 4294901760
    %1020 = vmatmul.mubr.f32.gmra.mrb[0].mxu0 %v1019
    %v1021 = vpop.f32.mrb[0].mxu0
    %v1022 = vadd.f32 %v719, %v1021
    %v1023 = vpop.f32.mrb[0].mxu0
    %1024 = vmatprep.mubr.f32.mxu0 0.0
    %v1025 = vand.u32 %v399, 4294901760
    %1026 = vmatmul.mubr.f32.gmra.mrb[0].mxu0 %v1025
    %v1027 = vpop.f32.mrb[0].mxu0
    %v1028 = vadd.f32 %v729, %v1027
    %v1029 = vpop.f32.mrb[0].mxu0
    %1030 = vmatprep.mubr.f32.mxu0 0.0
    %v1031 = vand.u32 %v402, 4294901760
    %1032 = vmatmul.mubr.f32.gmra.mrb[0].mxu0 %v1031
    %v1033 = vpop.f32.mrb[0].mxu0
    %v1034 = vadd.f32 %v739, %v1033
    %v1035 = vpop.f32.mrb[0].mxu0
    %1036 = vmatprep.mubr.f32.mxu0 0.0
    %v1037 = vand.u32 %v405, 4294901760
    %1038 = vmatmul.mubr.f32.gmra.mrb[0].mxu0 %v1037
    %v1039 = vpop.f32.mrb[0].mxu0
    %v1040 = vadd.f32 %v749, %v1039
    %v1041 = vpop.f32.mrb[0].mxu0
    %1042 = vmatprep.mubr.f32.mxu0 0.0
    %v1043 = vand.u32 %v408, 4294901760
    %1044 = vmatmul.mubr.f32.gmra.mrb[0].mxu0 %v1043
    %v1045 = vpop.f32.mrb[0].mxu0
    %v1046 = vadd.f32 %v759, %v1045
    %v1047 = vpop.f32.mrb[0].mxu0
    %1048 = vmatprep.mubr.f32.mxu0 0.0
    %v1049 = vand.u32 %v411, 4294901760
    %1050 = vmatmul.mubr.f32.gmra.mrb[0].mxu0 %v1049
    %v1051 = vpop.f32.mrb[0].mxu0
    %v1052 = vadd.f32 %v769, %v1051
    %v1053 = vpop.f32.mrb[0].mxu0
    %1054 = vmatprep.mubr.f32.mxu0 0.0
    %v1055 = vand.u32 %v414, 4294901760
    %1056 = vmatmul.mubr.f32.gmra.mrb[0].mxu0 %v1055
    %v1057 = vpop.f32.mrb[0].mxu0
    %v1058 = vadd.f32 %v779, %v1057
    %v1059 = vpop.f32.mrb[0].mxu0
    %1060 = vmatprep.mubr.f32.mxu0 0.0
    %v1061 = vand.u32 %v417, 4294901760
    %1062 = vmatmul.mubr.f32.gmra.mrb[0].mxu0 %v1061
    %v1063 = vpop.f32.mrb[0].mxu0
    %v1064 = vadd.f32 %v789, %v1063
    %v1065 = vpop.f32.mrb[0].mxu0
    %1066 = vmatprep.mubr.f32.mxu0 0.0
    %v1067 = vand.u32 %v420, 4294901760
    %1068 = vmatmul.mubr.f32.gmra.mrb[0].mxu0 %v1067
    %v1069 = vpop.f32.mrb[0].mxu0
    %v1070 = vadd.f32 %v799, %v1069
    %v1071 = vpop.f32.mrb[0].mxu0
    %1072 = vmatprep.mubr.f32.mxu0 0.0
    %v1073 = vand.u32 %v423, 4294901760
    %1074 = vmatmul.mubr.f32.gmra.mrb[0].mxu0 %v1073
    %v1075 = vpop.f32.mrb[0].mxu0
    %v1076 = vadd.f32 %v809, %v1075
    %v1077 = vpop.f32.mrb[0].mxu0
    %1078 = vdwg.mxu0
    %1079 = vmatprep.subr.mxu0 0.0
    %v1080 = vand.u32 %v327, 4294901760
    %v1081 = vsub.f32 %v327, %v1080
    %1082 = vmatpush1.msra.mxu0 %v1081
    %1083 = vmatprep.subr.mxu0 0.0
    %v1084 = vand.u32 %v328, 4294901760
    %v1085 = vsub.f32 %v328, %v1084
    %1086 = vmatpush1.msra.mxu0 %v1085
    %1087 = vmatprep.subr.mxu0 0.0
    %1088 = vmatpush1.msra.mxu0 0.0
    %1089 = vmatprep.subr.mxu0 0.0
    %1090 = vmatpush1.msra.mxu0 0.0
    %1091 = vmatprep.subr.mxu0 0.0
    %1092 = vmatpush1.msra.mxu0 0.0
    %1093 = vmatprep.subr.mxu0 0.0
    %1094 = vmatpush1.msra.mxu0 0.0
    %1095 = vmatprep.subr.mxu0 0.0
    %1096 = vmatpush1.msra.mxu0 0.0
    %1097 = vmatprep.subr.mxu0 0.0
    %1098 = vmatpush1.msra.mxu0 0.0
    %1099 = vmatprep.subr.mxu0 0.0
    %1100 = vmatpush1.msra.mxu0 0.0
    %1101 = vmatprep.subr.mxu0 0.0
    %1102 = vmatpush1.msra.mxu0 0.0
    %1103 = vmatprep.subr.mxu0 0.0
    %1104 = vmatpush1.msra.mxu0 0.0
    %1105 = vmatprep.subr.mxu0 0.0
    %1106 = vmatpush1.msra.mxu0 0.0
    %1107 = vmatprep.subr.mxu0 0.0
    %1108 = vmatpush1.msra.mxu0 0.0
    %1109 = vmatprep.subr.mxu0 0.0
    %1110 = vmatpush1.msra.mxu0 0.0
    %1111 = vmatprep.subr.mxu0 0.0
    %1112 = vmatpush1.msra.mxu0 0.0
    %1113 = vmatprep.subr.mxu0 0.0
    %1114 = vmatpush1.msra.mxu0 0.0
    %1115 = vmatprep.subr.mxu0 0.0
    %1116 = vmatpush1.msra.mxu0 0.0
    %1117 = vmatprep.subr.mxu0 0.0
    %1118 = vmatpush1.msra.mxu0 0.0
    %1119 = vmatprep.subr.mxu0 0.0
    %1120 = vmatpush1.msra.mxu0 0.0
    %1121 = vmatprep.subr.mxu0 0.0
    %1122 = vmatpush1.msra.mxu0 0.0
    %1123 = vmatprep.subr.mxu0 0.0
    %1124 = vmatpush1.msra.mxu0 0.0
    %1125 = vmatprep.subr.mxu0 0.0
    %1126 = vmatpush1.msra.mxu0 0.0
    %1127 = vmatprep.subr.mxu0 0.0
    %1128 = vmatpush1.msra.mxu0 0.0
    %1129 = vmatprep.subr.mxu0 0.0
    %1130 = vmatpush1.msra.mxu0 0.0
    %1131 = vmatprep.subr.mxu0 0.0
    %1132 = vmatpush1.msra.mxu0 0.0
    %1133 = vmatprep.subr.mxu0 0.0
    %1134 = vmatpush1.msra.mxu0 0.0
    %1135 = vmatprep.subr.mxu0 0.0
    %1136 = vmatpush1.msra.mxu0 0.0
    %1137 = vmatprep.subr.mxu0 0.0
    %1138 = vmatpush1.msra.mxu0 0.0
    %1139 = vmatprep.subr.mxu0 0.0
    %1140 = vmatpush1.msra.mxu0 0.0
    %1141 = vmatprep.subr.mxu0 0.0
    %1142 = vmatpush1.msra.mxu0 0.0
    %1143 = vmatprep.subr.mxu0 0.0
    %1144 = vmatpush1.msra.mxu0 0.0
    %1145 = vmatprep.subr.mxu0 0.0
    %1146 = vmatpush1.msra.mxu0 0.0
    %1147 = vmatprep.mubr.f32.mxu0 0.0
    %v1148 = vand.u32 %v330, 4294901760
    %v1149 = vsub.f32 %v330, %v1148
    %1150 = vmatmul.mubr.f32.gmra.mrb[0].mxu0 %v1149
    %v1151 = vpop.f32.mrb[0].mxu0
    %v1152 = vadd.f32 %v890, %v1151
    %v1153 = vpop.f32.mrb[0].mxu0
    %1154 = vmatprep.mubr.f32.mxu0 0.0
    %v1155 = vand.u32 %v333, 4294901760
    %v1156 = vsub.f32 %v333, %v1155
    %1157 = vmatmul.mubr.f32.gmra.mrb[0].mxu0 %v1156
    %v1158 = vpop.f32.mrb[0].mxu0
    %v1159 = vadd.f32 %v896, %v1158
    %v1160 = vpop.f32.mrb[0].mxu0
    %1161 = vmatprep.mubr.f32.mxu0 0.0
    %v1162 = vand.u32 %v336, 4294901760
    %v1163 = vsub.f32 %v336, %v1162
    %1164 = vmatmul.mubr.f32.gmra.mrb[0].mxu0 %v1163
    %v1165 = vpop.f32.mrb[0].mxu0
    %v1166 = vadd.f32 %v902, %v1165
    %v1167 = vpop.f32.mrb[0].mxu0
    %1168 = vmatprep.mubr.f32.mxu0 0.0
    %v1169 = vand.u32 %v339, 4294901760
    %v1170 = vsub.f32 %v339, %v1169
    %1171 = vmatmul.mubr.f32.gmra.mrb[0].mxu0 %v1170
    %v1172 = vpop.f32.mrb[0].mxu0
    %v1173 = vadd.f32 %v908, %v1172
    %v1174 = vpop.f32.mrb[0].mxu0
    %1175 = vmatprep.mubr.f32.mxu0 0.0
    %v1176 = vand.u32 %v342, 4294901760
    %v1177 = vsub.f32 %v342, %v1176
    %1178 = vmatmul.mubr.f32.gmra.mrb[0].mxu0 %v1177
    %v1179 = vpop.f32.mrb[0].mxu0
    %v1180 = vadd.f32 %v914, %v1179
    %v1181 = vpop.f32.mrb[0].mxu0
    %1182 = vmatprep.mubr.f32.mxu0 0.0
    %v1183 = vand.u32 %v345, 4294901760
    %v1184 = vsub.f32 %v345, %v1183
    %1185 = vmatmul.mubr.f32.gmra.mrb[0].mxu0 %v1184
    %v1186 = vpop.f32.mrb[0].mxu0
    %v1187 = vadd.f32 %v920, %v1186
    %v1188 = vpop.f32.mrb[0].mxu0
    %1189 = vmatprep.mubr.f32.mxu0 0.0
    %v1190 = vand.u32 %v348, 4294901760
    %v1191 = vsub.f32 %v348, %v1190
    %1192 = vmatmul.mubr.f32.gmra.mrb[0].mxu0 %v1191
    %v1193 = vpop.f32.mrb[0].mxu0
    %v1194 = vadd.f32 %v926, %v1193
    %v1195 = vpop.f32.mrb[0].mxu0
    %1196 = vmatprep.mubr.f32.mxu0 0.0
    %v1197 = vand.u32 %v351, 4294901760
    %v1198 = vsub.f32 %v351, %v1197
    %1199 = vmatmul.mubr.f32.gmra.mrb[0].mxu0 %v1198
    %v1200 = vpop.f32.mrb[0].mxu0
    %v1201 = vadd.f32 %v932, %v1200
    %v1202 = vpop.f32.mrb[0].mxu0
    %1203 = vmatprep.mubr.f32.mxu0 0.0
    %v1204 = vand.u32 %v354, 4294901760
    %v1205 = vsub.f32 %v354, %v1204
    %1206 = vmatmul.mubr.f32.gmra.mrb[0].mxu0 %v1205
    %v1207 = vpop.f32.mrb[0].mxu0
    %v1208 = vadd.f32 %v938, %v1207
    %v1209 = vpop.f32.mrb[0].mxu0
    %1210 = vmatprep.mubr.f32.mxu0 0.0
    %v1211 = vand.u32 %v357, 4294901760
    %v1212 = vsub.f32 %v357, %v1211
    %1213 = vmatmul.mubr.f32.gmra.mrb[0].mxu0 %v1212
    %v1214 = vpop.f32.mrb[0].mxu0
    %v1215 = vadd.f32 %v944, %v1214
    %v1216 = vpop.f32.mrb[0].mxu0
    %1217 = vmatprep.mubr.f32.mxu0 0.0
    %v1218 = vand.u32 %v360, 4294901760
    %v1219 = vsub.f32 %v360, %v1218
    %1220 = vmatmul.mubr.f32.gmra.mrb[0].mxu0 %v1219
    %v1221 = vpop.f32.mrb[0].mxu0
    %v1222 = vadd.f32 %v950, %v1221
    %v1223 = vpop.f32.mrb[0].mxu0
    %1224 = vmatprep.mubr.f32.mxu0 0.0
    %v1225 = vand.u32 %v363, 4294901760
    %v1226 = vsub.f32 %v363, %v1225
    %1227 = vmatmul.mubr.f32.gmra.mrb[0].mxu0 %v1226
    %v1228 = vpop.f32.mrb[0].mxu0
    %v1229 = vadd.f32 %v956, %v1228
    %v1230 = vpop.f32.mrb[0].mxu0
    %1231 = vmatprep.mubr.f32.mxu0 0.0
    %v1232 = vand.u32 %v366, 4294901760
    %v1233 = vsub.f32 %v366, %v1232
    %1234 = vmatmul.mubr.f32.gmra.mrb[0].mxu0 %v1233
    %v1235 = vpop.f32.mrb[0].mxu0
    %v1236 = vadd.f32 %v962, %v1235
    %v1237 = vpop.f32.mrb[0].mxu0
    %1238 = vmatprep.mubr.f32.mxu0 0.0
    %v1239 = vand.u32 %v369, 4294901760
    %v1240 = vsub.f32 %v369, %v1239
    %1241 = vmatmul.mubr.f32.gmra.mrb[0].mxu0 %v1240
    %v1242 = vpop.f32.mrb[0].mxu0
    %v1243 = vadd.f32 %v968, %v1242
    %v1244 = vpop.f32.mrb[0].mxu0
    %1245 = vmatprep.mubr.f32.mxu0 0.0
    %v1246 = vand.u32 %v372, 4294901760
    %v1247 = vsub.f32 %v372, %v1246
    %1248 = vmatmul.mubr.f32.gmra.mrb[0].mxu0 %v1247
    %v1249 = vpop.f32.mrb[0].mxu0
    %v1250 = vadd.f32 %v974, %v1249
    %v1251 = vpop.f32.mrb[0].mxu0
    %1252 = vmatprep.mubr.f32.mxu0 0.0
    %v1253 = vand.u32 %v375, 4294901760
    %v1254 = vsub.f32 %v375, %v1253
    %1255 = vmatmul.mubr.f32.gmra.mrb[0].mxu0 %v1254
    %v1256 = vpop.f32.mrb[0].mxu0
    %v1257 = vadd.f32 %v980, %v1256
    %v1258 = vpop.f32.mrb[0].mxu0
    %1259 = vmatprep.mubr.f32.mxu0 0.0
    %v1260 = vand.u32 %v378, 4294901760
    %v1261 = vsub.f32 %v378, %v1260
    %1262 = vmatmul.mubr.f32.gmra.mrb[0].mxu0 %v1261
    %v1263 = vpop.f32.mrb[0].mxu0
    %v1264 = vadd.f32 %v986, %v1263
    %v1265 = vpop.f32.mrb[0].mxu0
    %1266 = vmatprep.mubr.f32.mxu0 0.0
    %v1267 = vand.u32 %v381, 4294901760
    %v1268 = vsub.f32 %v381, %v1267
    %1269 = vmatmul.mubr.f32.gmra.mrb[0].mxu0 %v1268
    %v1270 = vpop.f32.mrb[0].mxu0
    %v1271 = vadd.f32 %v992, %v1270
    %v1272 = vpop.f32.mrb[0].mxu0
    %1273 = vmatprep.mubr.f32.mxu0 0.0
    %v1274 = vand.u32 %v384, 4294901760
    %v1275 = vsub.f32 %v384, %v1274
    %1276 = vmatmul.mubr.f32.gmra.mrb[0].mxu0 %v1275
    %v1277 = vpop.f32.mrb[0].mxu0
    %v1278 = vadd.f32 %v998, %v1277
    %v1279 = vpop.f32.mrb[0].mxu0
    %1280 = vmatprep.mubr.f32.mxu0 0.0
    %v1281 = vand.u32 %v387, 4294901760
    %v1282 = vsub.f32 %v387, %v1281
    %1283 = vmatmul.mubr.f32.gmra.mrb[0].mxu0 %v1282
    %v1284 = vpop.f32.mrb[0].mxu0
    %v1285 = vadd.f32 %v1004, %v1284
    %v1286 = vpop.f32.mrb[0].mxu0
    %1287 = vmatprep.mubr.f32.mxu0 0.0
    %v1288 = vand.u32 %v390, 4294901760
    %v1289 = vsub.f32 %v390, %v1288
    %1290 = vmatmul.mubr.f32.gmra.mrb[0].mxu0 %v1289
    %v1291 = vpop.f32.mrb[0].mxu0
    %v1292 = vadd.f32 %v1010, %v1291
    %v1293 = vpop.f32.mrb[0].mxu0
    %1294 = vmatprep.mubr.f32.mxu0 0.0
    %v1295 = vand.u32 %v393, 4294901760
    %v1296 = vsub.f32 %v393, %v1295
    %1297 = vmatmul.mubr.f32.gmra.mrb[0].mxu0 %v1296
    %v1298 = vpop.f32.mrb[0].mxu0
    %v1299 = vadd.f32 %v1016, %v1298
    %v1300 = vpop.f32.mrb[0].mxu0
    %1301 = vmatprep.mubr.f32.mxu0 0.0
    %v1302 = vand.u32 %v396, 4294901760
    %v1303 = vsub.f32 %v396, %v1302
    %1304 = vmatmul.mubr.f32.gmra.mrb[0].mxu0 %v1303
    %v1305 = vpop.f32.mrb[0].mxu0
    %v1306 = vadd.f32 %v1022, %v1305
    %v1307 = vpop.f32.mrb[0].mxu0
    %1308 = vmatprep.mubr.f32.mxu0 0.0
    %v1309 = vand.u32 %v399, 4294901760
    %v1310 = vsub.f32 %v399, %v1309
    %1311 = vmatmul.mubr.f32.gmra.mrb[0].mxu0 %v1310
    %v1312 = vpop.f32.mrb[0].mxu0
    %v1313 = vadd.f32 %v1028, %v1312
    %v1314 = vpop.f32.mrb[0].mxu0
    %1315 = vmatprep.mubr.f32.mxu0 0.0
    %v1316 = vand.u32 %v402, 4294901760
    %v1317 = vsub.f32 %v402, %v1316
    %1318 = vmatmul.mubr.f32.gmra.mrb[0].mxu0 %v1317
    %v1319 = vpop.f32.mrb[0].mxu0
    %v1320 = vadd.f32 %v1034, %v1319
    %v1321 = vpop.f32.mrb[0].mxu0
    %1322 = vmatprep.mubr.f32.mxu0 0.0
    %v1323 = vand.u32 %v405, 4294901760
    %v1324 = vsub.f32 %v405, %v1323
    %1325 = vmatmul.mubr.f32.gmra.mrb[0].mxu0 %v1324
    %v1326 = vpop.f32.mrb[0].mxu0
    %v1327 = vadd.f32 %v1040, %v1326
    %v1328 = vpop.f32.mrb[0].mxu0
    %1329 = vmatprep.mubr.f32.mxu0 0.0
    %v1330 = vand.u32 %v408, 4294901760
    %v1331 = vsub.f32 %v408, %v1330
    %1332 = vmatmul.mubr.f32.gmra.mrb[0].mxu0 %v1331
    %v1333 = vpop.f32.mrb[0].mxu0
    %v1334 = vadd.f32 %v1046, %v1333
    %v1335 = vpop.f32.mrb[0].mxu0
    %1336 = vmatprep.mubr.f32.mxu0 0.0
    %v1337 = vand.u32 %v411, 4294901760
    %v1338 = vsub.f32 %v411, %v1337
    %1339 = vmatmul.mubr.f32.gmra.mrb[0].mxu0 %v1338
    %v1340 = vpop.f32.mrb[0].mxu0
    %v1341 = vadd.f32 %v1052, %v1340
    %v1342 = vpop.f32.mrb[0].mxu0
    %1343 = vmatprep.mubr.f32.mxu0 0.0
    %v1344 = vand.u32 %v414, 4294901760
    %v1345 = vsub.f32 %v414, %v1344
    %1346 = vmatmul.mubr.f32.gmra.mrb[0].mxu0 %v1345
    %v1347 = vpop.f32.mrb[0].mxu0
    %v1348 = vadd.f32 %v1058, %v1347
    %v1349 = vpop.f32.mrb[0].mxu0
    %1350 = vmatprep.mubr.f32.mxu0 0.0
    %v1351 = vand.u32 %v417, 4294901760
    %v1352 = vsub.f32 %v417, %v1351
    %1353 = vmatmul.mubr.f32.gmra.mrb[0].mxu0 %v1352
    %v1354 = vpop.f32.mrb[0].mxu0
    %v1355 = vadd.f32 %v1064, %v1354
    %v1356 = vpop.f32.mrb[0].mxu0
    %1357 = vmatprep.mubr.f32.mxu0 0.0
    %v1358 = vand.u32 %v420, 4294901760
    %v1359 = vsub.f32 %v420, %v1358
    %1360 = vmatmul.mubr.f32.gmra.mrb[0].mxu0 %v1359
    %v1361 = vpop.f32.mrb[0].mxu0
    %v1362 = vadd.f32 %v1070, %v1361
    %v1363 = vpop.f32.mrb[0].mxu0
    %1364 = vmatprep.mubr.f32.mxu0 0.0
    %v1365 = vand.u32 %v423, 4294901760
    %v1366 = vsub.f32 %v423, %v1365
    %1367 = vmatmul.mubr.f32.gmra.mrb[0].mxu0 %v1366
    %v1368 = vpop.f32.mrb[0].mxu0
    %v1369 = vadd.f32 %v1076, %v1368
    %v1370 = vpop.f32.mrb[0].mxu0
    %1371 = vdwg.mxu0
    %1372 = vmatprep.subr.mxu0 0.0
    %v1373 = vand.u32 %v327, 4294901760
    %1374 = vmatpush1.msra.mxu0 %v1373
    %1375 = vmatprep.subr.mxu0 0.0
    %v1376 = vand.u32 %v328, 4294901760
    %1377 = vmatpush1.msra.mxu0 %v1376
    %1378 = vmatprep.subr.mxu0 0.0
    %1379 = vmatpush1.msra.mxu0 0.0
    %1380 = vmatprep.subr.mxu0 0.0
    %1381 = vmatpush1.msra.mxu0 0.0
    %1382 = vmatprep.subr.mxu0 0.0
    %1383 = vmatpush1.msra.mxu0 0.0
    %1384 = vmatprep.subr.mxu0 0.0
    %1385 = vmatpush1.msra.mxu0 0.0
    %1386 = vmatprep.subr.mxu0 0.0
    %1387 = vmatpush1.msra.mxu0 0.0
    %1388 = vmatprep.subr.mxu0 0.0
    %1389 = vmatpush1.msra.mxu0 0.0
    %1390 = vmatprep.subr.mxu0 0.0
    %1391 = vmatpush1.msra.mxu0 0.0
    %1392 = vmatprep.subr.mxu0 0.0
    %1393 = vmatpush1.msra.mxu0 0.0
    %1394 = vmatprep.subr.mxu0 0.0
    %1395 = vmatpush1.msra.mxu0 0.0
    %1396 = vmatprep.subr.mxu0 0.0
    %1397 = vmatpush1.msra.mxu0 0.0
    %1398 = vmatprep.subr.mxu0 0.0
    %1399 = vmatpush1.msra.mxu0 0.0
    %1400 = vmatprep.subr.mxu0 0.0
    %1401 = vmatpush1.msra.mxu0 0.0
    %1402 = vmatprep.subr.mxu0 0.0
    %1403 = vmatpush1.msra.mxu0 0.0
    %1404 = vmatprep.subr.mxu0 0.0
    %1405 = vmatpush1.msra.mxu0 0.0
    %1406 = vmatprep.subr.mxu0 0.0
    %1407 = vmatpush1.msra.mxu0 0.0
    %1408 = vmatprep.subr.mxu0 0.0
    %1409 = vmatpush1.msra.mxu0 0.0
    %1410 = vmatprep.subr.mxu0 0.0
    %1411 = vmatpush1.msra.mxu0 0.0
    %1412 = vmatprep.subr.mxu0 0.0
    %1413 = vmatpush1.msra.mxu0 0.0
    %1414 = vmatprep.subr.mxu0 0.0
    %1415 = vmatpush1.msra.mxu0 0.0
    %1416 = vmatprep.subr.mxu0 0.0
    %1417 = vmatpush1.msra.mxu0 0.0
    %1418 = vmatprep.subr.mxu0 0.0
    %1419 = vmatpush1.msra.mxu0 0.0
    %1420 = vmatprep.subr.mxu0 0.0
    %1421 = vmatpush1.msra.mxu0 0.0
    %1422 = vmatprep.subr.mxu0 0.0
    %1423 = vmatpush1.msra.mxu0 0.0
    %1424 = vmatprep.subr.mxu0 0.0
    %1425 = vmatpush1.msra.mxu0 0.0
    %1426 = vmatprep.subr.mxu0 0.0
    %1427 = vmatpush1.msra.mxu0 0.0
    %1428 = vmatprep.subr.mxu0 0.0
    %1429 = vmatpush1.msra.mxu0 0.0
    %1430 = vmatprep.subr.mxu0 0.0
    %1431 = vmatpush1.msra.mxu0 0.0
    %1432 = vmatprep.subr.mxu0 0.0
    %1433 = vmatpush1.msra.mxu0 0.0
    %1434 = vmatprep.subr.mxu0 0.0
    %1435 = vmatpush1.msra.mxu0 0.0
    %1436 = vmatprep.subr.mxu0 0.0
    %1437 = vmatpush1.msra.mxu0 0.0
    %1438 = vmatprep.mubr.f32.mxu0 0.0
    %v1439 = vand.u32 %v330, 4294901760
    %v1440 = vsub.f32 %v330, %v1439
    %v1441 = vand.u32 %v1440, 4294901760
    %1442 = vmatmul.mubr.f32.gmra.mrb[0].mxu0 %v1441
    %v1443 = vpop.f32.mrb[0].mxu0
    %v1444 = vadd.f32 %v1152, %v1443
    %v1445 = vpop.f32.mrb[0].mxu0
    %1446 = vmatprep.mubr.f32.mxu0 0.0
    %v1447 = vand.u32 %v333, 4294901760
    %v1448 = vsub.f32 %v333, %v1447
    %v1449 = vand.u32 %v1448, 4294901760
    %1450 = vmatmul.mubr.f32.gmra.mrb[0].mxu0 %v1449
    %v1451 = vpop.f32.mrb[0].mxu0
    %v1452 = vadd.f32 %v1159, %v1451
    %v1453 = vpop.f32.mrb[0].mxu0
    %1454 = vmatprep.mubr.f32.mxu0 0.0
    %v1455 = vand.u32 %v336, 4294901760
    %v1456 = vsub.f32 %v336, %v1455
    %v1457 = vand.u32 %v1456, 4294901760
    %1458 = vmatmul.mubr.f32.gmra.mrb[0].mxu0 %v1457
    %v1459 = vpop.f32.mrb[0].mxu0
    %v1460 = vadd.f32 %v1166, %v1459
    %v1461 = vpop.f32.mrb[0].mxu0
    %1462 = vmatprep.mubr.f32.mxu0 0.0
    %v1463 = vand.u32 %v339, 4294901760
    %v1464 = vsub.f32 %v339, %v1463
    %v1465 = vand.u32 %v1464, 4294901760
    %1466 = vmatmul.mubr.f32.gmra.mrb[0].mxu0 %v1465
    %v1467 = vpop.f32.mrb[0].mxu0
    %v1468 = vadd.f32 %v1173, %v1467
    %v1469 = vpop.f32.mrb[0].mxu0
    %1470 = vmatprep.mubr.f32.mxu0 0.0
    %v1471 = vand.u32 %v342, 4294901760
    %v1472 = vsub.f32 %v342, %v1471
    %v1473 = vand.u32 %v1472, 4294901760
    %1474 = vmatmul.mubr.f32.gmra.mrb[0].mxu0 %v1473
    %v1475 = vpop.f32.mrb[0].mxu0
    %v1476 = vadd.f32 %v1180, %v1475
    %v1477 = vpop.f32.mrb[0].mxu0
    %1478 = vmatprep.mubr.f32.mxu0 0.0
    %v1479 = vand.u32 %v345, 4294901760
    %v1480 = vsub.f32 %v345, %v1479
    %v1481 = vand.u32 %v1480, 4294901760
    %1482 = vmatmul.mubr.f32.gmra.mrb[0].mxu0 %v1481
    %v1483 = vpop.f32.mrb[0].mxu0
    %v1484 = vadd.f32 %v1187, %v1483
    %v1485 = vpop.f32.mrb[0].mxu0
    %1486 = vmatprep.mubr.f32.mxu0 0.0
    %v1487 = vand.u32 %v348, 4294901760
    %v1488 = vsub.f32 %v348, %v1487
    %v1489 = vand.u32 %v1488, 4294901760
    %1490 = vmatmul.mubr.f32.gmra.mrb[0].mxu0 %v1489
    %v1491 = vpop.f32.mrb[0].mxu0
    %v1492 = vadd.f32 %v1194, %v1491
    %v1493 = vpop.f32.mrb[0].mxu0
    %1494 = vmatprep.mubr.f32.mxu0 0.0
    %v1495 = vand.u32 %v351, 4294901760
    %v1496 = vsub.f32 %v351, %v1495
    %v1497 = vand.u32 %v1496, 4294901760
    %1498 = vmatmul.mubr.f32.gmra.mrb[0].mxu0 %v1497
    %v1499 = vpop.f32.mrb[0].mxu0
    %v1500 = vadd.f32 %v1201, %v1499
    %v1501 = vpop.f32.mrb[0].mxu0
    %1502 = vmatprep.mubr.f32.mxu0 0.0
    %v1503 = vand.u32 %v354, 4294901760
    %v1504 = vsub.f32 %v354, %v1503
    %v1505 = vand.u32 %v1504, 4294901760
    %1506 = vmatmul.mubr.f32.gmra.mrb[0].mxu0 %v1505
    %v1507 = vpop.f32.mrb[0].mxu0
    %v1508 = vadd.f32 %v1208, %v1507
    %v1509 = vpop.f32.mrb[0].mxu0
    %1510 = vmatprep.mubr.f32.mxu0 0.0
    %v1511 = vand.u32 %v357, 4294901760
    %v1512 = vsub.f32 %v357, %v1511
    %v1513 = vand.u32 %v1512, 4294901760
    %1514 = vmatmul.mubr.f32.gmra.mrb[0].mxu0 %v1513
    %v1515 = vpop.f32.mrb[0].mxu0
    %v1516 = vadd.f32 %v1215, %v1515
    %v1517 = vpop.f32.mrb[0].mxu0
    %1518 = vmatprep.mubr.f32.mxu0 0.0
    %v1519 = vand.u32 %v360, 4294901760
    %v1520 = vsub.f32 %v360, %v1519
    %v1521 = vand.u32 %v1520, 4294901760
    %1522 = vmatmul.mubr.f32.gmra.mrb[0].mxu0 %v1521
    %v1523 = vpop.f32.mrb[0].mxu0
    %v1524 = vadd.f32 %v1222, %v1523
    %v1525 = vpop.f32.mrb[0].mxu0
    %1526 = vmatprep.mubr.f32.mxu0 0.0
    %v1527 = vand.u32 %v363, 4294901760
    %v1528 = vsub.f32 %v363, %v1527
    %v1529 = vand.u32 %v1528, 4294901760
    %1530 = vmatmul.mubr.f32.gmra.mrb[0].mxu0 %v1529
    %v1531 = vpop.f32.mrb[0].mxu0
    %v1532 = vadd.f32 %v1229, %v1531
    %v1533 = vpop.f32.mrb[0].mxu0
    %1534 = vmatprep.mubr.f32.mxu0 0.0
    %v1535 = vand.u32 %v366, 4294901760
    %v1536 = vsub.f32 %v366, %v1535
    %v1537 = vand.u32 %v1536, 4294901760
    %1538 = vmatmul.mubr.f32.gmra.mrb[0].mxu0 %v1537
    %v1539 = vpop.f32.mrb[0].mxu0
    %v1540 = vadd.f32 %v1236, %v1539
    %v1541 = vpop.f32.mrb[0].mxu0
    %1542 = vmatprep.mubr.f32.mxu0 0.0
    %v1543 = vand.u32 %v369, 4294901760
    %v1544 = vsub.f32 %v369, %v1543
    %v1545 = vand.u32 %v1544, 4294901760
    %1546 = vmatmul.mubr.f32.gmra.mrb[0].mxu0 %v1545
    %v1547 = vpop.f32.mrb[0].mxu0
    %v1548 = vadd.f32 %v1243, %v1547
    %v1549 = vpop.f32.mrb[0].mxu0
    %1550 = vmatprep.mubr.f32.mxu0 0.0
    %v1551 = vand.u32 %v372, 4294901760
    %v1552 = vsub.f32 %v372, %v1551
    %v1553 = vand.u32 %v1552, 4294901760
    %1554 = vmatmul.mubr.f32.gmra.mrb[0].mxu0 %v1553
    %v1555 = vpop.f32.mrb[0].mxu0
    %v1556 = vadd.f32 %v1250, %v1555
    %v1557 = vpop.f32.mrb[0].mxu0
    %1558 = vmatprep.mubr.f32.mxu0 0.0
    %v1559 = vand.u32 %v375, 4294901760
    %v1560 = vsub.f32 %v375, %v1559
    %v1561 = vand.u32 %v1560, 4294901760
    %1562 = vmatmul.mubr.f32.gmra.mrb[0].mxu0 %v1561
    %v1563 = vpop.f32.mrb[0].mxu0
    %v1564 = vadd.f32 %v1257, %v1563
    %v1565 = vpop.f32.mrb[0].mxu0
    %1566 = vmatprep.mubr.f32.mxu0 0.0
    %v1567 = vand.u32 %v378, 4294901760
    %v1568 = vsub.f32 %v378, %v1567
    %v1569 = vand.u32 %v1568, 4294901760
    %1570 = vmatmul.mubr.f32.gmra.mrb[0].mxu0 %v1569
    %v1571 = vpop.f32.mrb[0].mxu0
    %v1572 = vadd.f32 %v1264, %v1571
    %v1573 = vpop.f32.mrb[0].mxu0
    %1574 = vmatprep.mubr.f32.mxu0 0.0
    %v1575 = vand.u32 %v381, 4294901760
    %v1576 = vsub.f32 %v381, %v1575
    %v1577 = vand.u32 %v1576, 4294901760
    %1578 = vmatmul.mubr.f32.gmra.mrb[0].mxu0 %v1577
    %v1579 = vpop.f32.mrb[0].mxu0
    %v1580 = vadd.f32 %v1271, %v1579
    %v1581 = vpop.f32.mrb[0].mxu0
    %1582 = vmatprep.mubr.f32.mxu0 0.0
    %v1583 = vand.u32 %v384, 4294901760
    %v1584 = vsub.f32 %v384, %v1583
    %v1585 = vand.u32 %v1584, 4294901760
    %1586 = vmatmul.mubr.f32.gmra.mrb[0].mxu0 %v1585
    %v1587 = vpop.f32.mrb[0].mxu0
    %v1588 = vadd.f32 %v1278, %v1587
    %v1589 = vpop.f32.mrb[0].mxu0
    %1590 = vmatprep.mubr.f32.mxu0 0.0
    %v1591 = vand.u32 %v387, 4294901760
    %v1592 = vsub.f32 %v387, %v1591
    %v1593 = vand.u32 %v1592, 4294901760
    %1594 = vmatmul.mubr.f32.gmra.mrb[0].mxu0 %v1593
    %v1595 = vpop.f32.mrb[0].mxu0
    %v1596 = vadd.f32 %v1285, %v1595
    %v1597 = vpop.f32.mrb[0].mxu0
    %1598 = vmatprep.mubr.f32.mxu0 0.0
    %v1599 = vand.u32 %v390, 4294901760
    %v1600 = vsub.f32 %v390, %v1599
    %v1601 = vand.u32 %v1600, 4294901760
    %1602 = vmatmul.mubr.f32.gmra.mrb[0].mxu0 %v1601
    %v1603 = vpop.f32.mrb[0].mxu0
    %v1604 = vadd.f32 %v1292, %v1603
    %v1605 = vpop.f32.mrb[0].mxu0
    %1606 = vmatprep.mubr.f32.mxu0 0.0
    %v1607 = vand.u32 %v393, 4294901760
    %v1608 = vsub.f32 %v393, %v1607
    %v1609 = vand.u32 %v1608, 4294901760
    %1610 = vmatmul.mubr.f32.gmra.mrb[0].mxu0 %v1609
    %v1611 = vpop.f32.mrb[0].mxu0
    %v1612 = vadd.f32 %v1299, %v1611
    %v1613 = vpop.f32.mrb[0].mxu0
    %1614 = vmatprep.mubr.f32.mxu0 0.0
    %v1615 = vand.u32 %v396, 4294901760
    %v1616 = vsub.f32 %v396, %v1615
    %v1617 = vand.u32 %v1616, 4294901760
    %1618 = vmatmul.mubr.f32.gmra.mrb[0].mxu0 %v1617
    %v1619 = vpop.f32.mrb[0].mxu0
    %v1620 = vadd.f32 %v1306, %v1619
    %v1621 = vpop.f32.mrb[0].mxu0
    %1622 = vmatprep.mubr.f32.mxu0 0.0
    %v1623 = vand.u32 %v399, 4294901760
    %v1624 = vsub.f32 %v399, %v1623
    %v1625 = vand.u32 %v1624, 4294901760
    %1626 = vmatmul.mubr.f32.gmra.mrb[0].mxu0 %v1625
    %v1627 = vpop.f32.mrb[0].mxu0
    %v1628 = vadd.f32 %v1313, %v1627
    %v1629 = vpop.f32.mrb[0].mxu0
    %1630 = vmatprep.mubr.f32.mxu0 0.0
    %v1631 = vand.u32 %v402, 4294901760
    %v1632 = vsub.f32 %v402, %v1631
    %v1633 = vand.u32 %v1632, 4294901760
    %1634 = vmatmul.mubr.f32.gmra.mrb[0].mxu0 %v1633
    %v1635 = vpop.f32.mrb[0].mxu0
    %v1636 = vadd.f32 %v1320, %v1635
    %v1637 = vpop.f32.mrb[0].mxu0
    %1638 = vmatprep.mubr.f32.mxu0 0.0
    %v1639 = vand.u32 %v405, 4294901760
    %v1640 = vsub.f32 %v405, %v1639
    %v1641 = vand.u32 %v1640, 4294901760
    %1642 = vmatmul.mubr.f32.gmra.mrb[0].mxu0 %v1641
    %v1643 = vpop.f32.mrb[0].mxu0
    %v1644 = vadd.f32 %v1327, %v1643
    %v1645 = vpop.f32.mrb[0].mxu0
    %1646 = vmatprep.mubr.f32.mxu0 0.0
    %v1647 = vand.u32 %v408, 4294901760
    %v1648 = vsub.f32 %v408, %v1647
    %v1649 = vand.u32 %v1648, 4294901760
    %1650 = vmatmul.mubr.f32.gmra.mrb[0].mxu0 %v1649
    %v1651 = vpop.f32.mrb[0].mxu0
    %v1652 = vadd.f32 %v1334, %v1651
    %v1653 = vpop.f32.mrb[0].mxu0
    %1654 = vmatprep.mubr.f32.mxu0 0.0
    %v1655 = vand.u32 %v411, 4294901760
    %v1656 = vsub.f32 %v411, %v1655
    %v1657 = vand.u32 %v1656, 4294901760
    %1658 = vmatmul.mubr.f32.gmra.mrb[0].mxu0 %v1657
    %v1659 = vpop.f32.mrb[0].mxu0
    %v1660 = vadd.f32 %v1341, %v1659
    %v1661 = vpop.f32.mrb[0].mxu0
    %1662 = vmatprep.mubr.f32.mxu0 0.0
    %v1663 = vand.u32 %v414, 4294901760
    %v1664 = vsub.f32 %v414, %v1663
    %v1665 = vand.u32 %v1664, 4294901760
    %1666 = vmatmul.mubr.f32.gmra.mrb[0].mxu0 %v1665
    %v1667 = vpop.f32.mrb[0].mxu0
    %v1668 = vadd.f32 %v1348, %v1667
    %v1669 = vpop.f32.mrb[0].mxu0
    %1670 = vmatprep.mubr.f32.mxu0 0.0
    %v1671 = vand.u32 %v417, 4294901760
    %v1672 = vsub.f32 %v417, %v1671
    %v1673 = vand.u32 %v1672, 4294901760
    %1674 = vmatmul.mubr.f32.gmra.mrb[0].mxu0 %v1673
    %v1675 = vpop.f32.mrb[0].mxu0
    %v1676 = vadd.f32 %v1355, %v1675
    %v1677 = vpop.f32.mrb[0].mxu0
    %1678 = vmatprep.mubr.f32.mxu0 0.0
    %v1679 = vand.u32 %v420, 4294901760
    %v1680 = vsub.f32 %v420, %v1679
    %v1681 = vand.u32 %v1680, 4294901760
    %1682 = vmatmul.mubr.f32.gmra.mrb[0].mxu0 %v1681
    %v1683 = vpop.f32.mrb[0].mxu0
    %v1684 = vadd.f32 %v1362, %v1683
    %v1685 = vpop.f32.mrb[0].mxu0
    %1686 = vmatprep.mubr.f32.mxu0 0.0
    %v1687 = vand.u32 %v423, 4294901760
    %v1688 = vsub.f32 %v423, %v1687
    %v1689 = vand.u32 %v1688, 4294901760
    %1690 = vmatmul.mubr.f32.gmra.mrb[0].mxu0 %v1689
    %v1691 = vpop.f32.mrb[0].mxu0
    %v1692 = vadd.f32 %v1369, %v1691
    %v1693 = vpop.f32.mrb[0].mxu0
    %1694 = vdwg.mxu0
    %1695 = vmatprep.subr.mxu0 0.0
    %v1696 = vand.u32 %v327, 4294901760
    %v1697 = vsub.f32 %v327, %v1696
    %v1698 = vand.u32 %v1697, 4294901760
    %1699 = vmatpush1.msra.mxu0 %v1698
    %1700 = vmatprep.subr.mxu0 0.0
    %v1701 = vand.u32 %v328, 4294901760
    %v1702 = vsub.f32 %v328, %v1701
    %v1703 = vand.u32 %v1702, 4294901760
    %1704 = vmatpush1.msra.mxu0 %v1703
    %1705 = vmatprep.subr.mxu0 0.0
    %1706 = vmatpush1.msra.mxu0 0.0
    %1707 = vmatprep.subr.mxu0 0.0
    %1708 = vmatpush1.msra.mxu0 0.0
    %1709 = vmatprep.subr.mxu0 0.0
    %1710 = vmatpush1.msra.mxu0 0.0
    %1711 = vmatprep.subr.mxu0 0.0
    %1712 = vmatpush1.msra.mxu0 0.0
    %1713 = vmatprep.subr.mxu0 0.0
    %1714 = vmatpush1.msra.mxu0 0.0
    %1715 = vmatprep.subr.mxu0 0.0
    %1716 = vmatpush1.msra.mxu0 0.0
    %1717 = vmatprep.subr.mxu0 0.0
    %1718 = vmatpush1.msra.mxu0 0.0
    %1719 = vmatprep.subr.mxu0 0.0
    %1720 = vmatpush1.msra.mxu0 0.0
    %1721 = vmatprep.subr.mxu0 0.0
    %1722 = vmatpush1.msra.mxu0 0.0
    %1723 = vmatprep.subr.mxu0 0.0
    %1724 = vmatpush1.msra.mxu0 0.0
    %1725 = vmatprep.subr.mxu0 0.0
    %1726 = vmatpush1.msra.mxu0 0.0
    %1727 = vmatprep.subr.mxu0 0.0
    %1728 = vmatpush1.msra.mxu0 0.0
    %1729 = vmatprep.subr.mxu0 0.0
    %1730 = vmatpush1.msra.mxu0 0.0
    %1731 = vmatprep.subr.mxu0 0.0
    %1732 = vmatpush1.msra.mxu0 0.0
    %1733 = vmatprep.subr.mxu0 0.0
    %1734 = vmatpush1.msra.mxu0 0.0
    %1735 = vmatprep.subr.mxu0 0.0
    %1736 = vmatpush1.msra.mxu0 0.0
    %1737 = vmatprep.subr.mxu0 0.0
    %1738 = vmatpush1.msra.mxu0 0.0
    %1739 = vmatprep.subr.mxu0 0.0
    %1740 = vmatpush1.msra.mxu0 0.0
    %1741 = vmatprep.subr.mxu0 0.0
    %1742 = vmatpush1.msra.mxu0 0.0
    %1743 = vmatprep.subr.mxu0 0.0
    %1744 = vmatpush1.msra.mxu0 0.0
    %1745 = vmatprep.subr.mxu0 0.0
    %1746 = vmatpush1.msra.mxu0 0.0
    %1747 = vmatprep.subr.mxu0 0.0
    %1748 = vmatpush1.msra.mxu0 0.0
    %1749 = vmatprep.subr.mxu0 0.0
    %1750 = vmatpush1.msra.mxu0 0.0
    %1751 = vmatprep.subr.mxu0 0.0
    %1752 = vmatpush1.msra.mxu0 0.0
    %1753 = vmatprep.subr.mxu0 0.0
    %1754 = vmatpush1.msra.mxu0 0.0
    %1755 = vmatprep.subr.mxu0 0.0
    %1756 = vmatpush1.msra.mxu0 0.0
    %1757 = vmatprep.subr.mxu0 0.0
    %1758 = vmatpush1.msra.mxu0 0.0
    %1759 = vmatprep.subr.mxu0 0.0
    %1760 = vmatpush1.msra.mxu0 0.0
    %1761 = vmatprep.subr.mxu0 0.0
    %1762 = vmatpush1.msra.mxu0 0.0
    %1763 = vmatprep.subr.mxu0 0.0
    %1764 = vmatpush1.msra.mxu0 0.0
    %1765 = vmatprep.mubr.f32.mxu0 0.0
    %v1766 = vand.u32 %v330, 4294901760
    %1767 = vmatmul.mubr.f32.gmra.mrb[0].mxu0 %v1766
    %v1768 = vpop.f32.mrb[0].mxu0
    %v1769 = vadd.f32 %v1444, %v1768
    %v1770 = vpop.f32.mrb[0].mxu0
    %1771 = vmatprep.mubr.f32.mxu0 0.0
    %v1772 = vand.u32 %v333, 4294901760
    %1773 = vmatmul.mubr.f32.gmra.mrb[0].mxu0 %v1772
    %v1774 = vpop.f32.mrb[0].mxu0
    %v1775 = vadd.f32 %v1452, %v1774
    %v1776 = vpop.f32.mrb[0].mxu0
    %1777 = vmatprep.mubr.f32.mxu0 0.0
    %v1778 = vand.u32 %v336, 4294901760
    %1779 = vmatmul.mubr.f32.gmra.mrb[0].mxu0 %v1778
    %v1780 = vpop.f32.mrb[0].mxu0
    %v1781 = vadd.f32 %v1460, %v1780
    %v1782 = vpop.f32.mrb[0].mxu0
    %1783 = vmatprep.mubr.f32.mxu0 0.0
    %v1784 = vand.u32 %v339, 4294901760
    %1785 = vmatmul.mubr.f32.gmra.mrb[0].mxu0 %v1784
    %v1786 = vpop.f32.mrb[0].mxu0
    %v1787 = vadd.f32 %v1468, %v1786
    %v1788 = vpop.f32.mrb[0].mxu0
    %1789 = vmatprep.mubr.f32.mxu0 0.0
    %v1790 = vand.u32 %v342, 4294901760
    %1791 = vmatmul.mubr.f32.gmra.mrb[0].mxu0 %v1790
    %v1792 = vpop.f32.mrb[0].mxu0
    %v1793 = vadd.f32 %v1476, %v1792
    %v1794 = vpop.f32.mrb[0].mxu0
    %1795 = vmatprep.mubr.f32.mxu0 0.0
    %v1796 = vand.u32 %v345, 4294901760
    %1797 = vmatmul.mubr.f32.gmra.mrb[0].mxu0 %v1796
    %v1798 = vpop.f32.mrb[0].mxu0
    %v1799 = vadd.f32 %v1484, %v1798
    %v1800 = vpop.f32.mrb[0].mxu0
    %1801 = vmatprep.mubr.f32.mxu0 0.0
    %v1802 = vand.u32 %v348, 4294901760
    %1803 = vmatmul.mubr.f32.gmra.mrb[0].mxu0 %v1802
    %v1804 = vpop.f32.mrb[0].mxu0
    %v1805 = vadd.f32 %v1492, %v1804
    %v1806 = vpop.f32.mrb[0].mxu0
    %1807 = vmatprep.mubr.f32.mxu0 0.0
    %v1808 = vand.u32 %v351, 4294901760
    %1809 = vmatmul.mubr.f32.gmra.mrb[0].mxu0 %v1808
    %v1810 = vpop.f32.mrb[0].mxu0
    %v1811 = vadd.f32 %v1500, %v1810
    %v1812 = vpop.f32.mrb[0].mxu0
    %1813 = vmatprep.mubr.f32.mxu0 0.0
    %v1814 = vand.u32 %v354, 4294901760
    %1815 = vmatmul.mubr.f32.gmra.mrb[0].mxu0 %v1814
    %v1816 = vpop.f32.mrb[0].mxu0
    %v1817 = vadd.f32 %v1508, %v1816
    %v1818 = vpop.f32.mrb[0].mxu0
    %1819 = vmatprep.mubr.f32.mxu0 0.0
    %v1820 = vand.u32 %v357, 4294901760
    %1821 = vmatmul.mubr.f32.gmra.mrb[0].mxu0 %v1820
    %v1822 = vpop.f32.mrb[0].mxu0
    %v1823 = vadd.f32 %v1516, %v1822
    %v1824 = vpop.f32.mrb[0].mxu0
    %1825 = vmatprep.mubr.f32.mxu0 0.0
    %v1826 = vand.u32 %v360, 4294901760
    %1827 = vmatmul.mubr.f32.gmra.mrb[0].mxu0 %v1826
    %v1828 = vpop.f32.mrb[0].mxu0
    %v1829 = vadd.f32 %v1524, %v1828
    %v1830 = vpop.f32.mrb[0].mxu0
    %1831 = vmatprep.mubr.f32.mxu0 0.0
    %v1832 = vand.u32 %v363, 4294901760
    %1833 = vmatmul.mubr.f32.gmra.mrb[0].mxu0 %v1832
    %v1834 = vpop.f32.mrb[0].mxu0
    %v1835 = vadd.f32 %v1532, %v1834
    %v1836 = vpop.f32.mrb[0].mxu0
    %1837 = vmatprep.mubr.f32.mxu0 0.0
    %v1838 = vand.u32 %v366, 4294901760
    %1839 = vmatmul.mubr.f32.gmra.mrb[0].mxu0 %v1838
    %v1840 = vpop.f32.mrb[0].mxu0
    %v1841 = vadd.f32 %v1540, %v1840
    %v1842 = vpop.f32.mrb[0].mxu0
    %1843 = vmatprep.mubr.f32.mxu0 0.0
    %v1844 = vand.u32 %v369, 4294901760
    %1845 = vmatmul.mubr.f32.gmra.mrb[0].mxu0 %v1844
    %v1846 = vpop.f32.mrb[0].mxu0
    %v1847 = vadd.f32 %v1548, %v1846
    %v1848 = vpop.f32.mrb[0].mxu0
    %1849 = vmatprep.mubr.f32.mxu0 0.0
    %v1850 = vand.u32 %v372, 4294901760
    %1851 = vmatmul.mubr.f32.gmra.mrb[0].mxu0 %v1850
    %v1852 = vpop.f32.mrb[0].mxu0
    %v1853 = vadd.f32 %v1556, %v1852
    %v1854 = vpop.f32.mrb[0].mxu0
    %1855 = vmatprep.mubr.f32.mxu0 0.0
    %v1856 = vand.u32 %v375, 4294901760
    %1857 = vmatmul.mubr.f32.gmra.mrb[0].mxu0 %v1856
    %v1858 = vpop.f32.mrb[0].mxu0
    %v1859 = vadd.f32 %v1564, %v1858
    %v1860 = vpop.f32.mrb[0].mxu0
    %1861 = vmatprep.mubr.f32.mxu0 0.0
    %v1862 = vand.u32 %v378, 4294901760
    %1863 = vmatmul.mubr.f32.gmra.mrb[0].mxu0 %v1862
    %v1864 = vpop.f32.mrb[0].mxu0
    %v1865 = vadd.f32 %v1572, %v1864
    %v1866 = vpop.f32.mrb[0].mxu0
    %1867 = vmatprep.mubr.f32.mxu0 0.0
    %v1868 = vand.u32 %v381, 4294901760
    %1869 = vmatmul.mubr.f32.gmra.mrb[0].mxu0 %v1868
    %v1870 = vpop.f32.mrb[0].mxu0
    %v1871 = vadd.f32 %v1580, %v1870
    %v1872 = vpop.f32.mrb[0].mxu0
    %1873 = vmatprep.mubr.f32.mxu0 0.0
    %v1874 = vand.u32 %v384, 4294901760
    %1875 = vmatmul.mubr.f32.gmra.mrb[0].mxu0 %v1874
    %v1876 = vpop.f32.mrb[0].mxu0
    %v1877 = vadd.f32 %v1588, %v1876
    %v1878 = vpop.f32.mrb[0].mxu0
    %1879 = vmatprep.mubr.f32.mxu0 0.0
    %v1880 = vand.u32 %v387, 4294901760
    %1881 = vmatmul.mubr.f32.gmra.mrb[0].mxu0 %v1880
    %v1882 = vpop.f32.mrb[0].mxu0
    %v1883 = vadd.f32 %v1596, %v1882
    %v1884 = vpop.f32.mrb[0].mxu0
    %1885 = vmatprep.mubr.f32.mxu0 0.0
    %v1886 = vand.u32 %v390, 4294901760
    %1887 = vmatmul.mubr.f32.gmra.mrb[0].mxu0 %v1886
    %v1888 = vpop.f32.mrb[0].mxu0
    %v1889 = vadd.f32 %v1604, %v1888
    %v1890 = vpop.f32.mrb[0].mxu0
    %1891 = vmatprep.mubr.f32.mxu0 0.0
    %v1892 = vand.u32 %v393, 4294901760
    %1893 = vmatmul.mubr.f32.gmra.mrb[0].mxu0 %v1892
    %v1894 = vpop.f32.mrb[0].mxu0
    %v1895 = vadd.f32 %v1612, %v1894
    %v1896 = vpop.f32.mrb[0].mxu0
    %1897 = vmatprep.mubr.f32.mxu0 0.0
    %v1898 = vand.u32 %v396, 4294901760
    %1899 = vmatmul.mubr.f32.gmra.mrb[0].mxu0 %v1898
    %v1900 = vpop.f32.mrb[0].mxu0
    %v1901 = vadd.f32 %v1620, %v1900
    %v1902 = vpop.f32.mrb[0].mxu0
    %1903 = vmatprep.mubr.f32.mxu0 0.0
    %v1904 = vand.u32 %v399, 4294901760
    %1905 = vmatmul.mubr.f32.gmra.mrb[0].mxu0 %v1904
    %v1906 = vpop.f32.mrb[0].mxu0
    %v1907 = vadd.f32 %v1628, %v1906
    %v1908 = vpop.f32.mrb[0].mxu0
    %1909 = vmatprep.mubr.f32.mxu0 0.0
    %v1910 = vand.u32 %v402, 4294901760
    %1911 = vmatmul.mubr.f32.gmra.mrb[0].mxu0 %v1910
    %v1912 = vpop.f32.mrb[0].mxu0
    %v1913 = vadd.f32 %v1636, %v1912
    %v1914 = vpop.f32.mrb[0].mxu0
    %1915 = vmatprep.mubr.f32.mxu0 0.0
    %v1916 = vand.u32 %v405, 4294901760
    %1917 = vmatmul.mubr.f32.gmra.mrb[0].mxu0 %v1916
    %v1918 = vpop.f32.mrb[0].mxu0
    %v1919 = vadd.f32 %v1644, %v1918
    %v1920 = vpop.f32.mrb[0].mxu0
    %1921 = vmatprep.mubr.f32.mxu0 0.0
    %v1922 = vand.u32 %v408, 4294901760
    %1923 = vmatmul.mubr.f32.gmra.mrb[0].mxu0 %v1922
    %v1924 = vpop.f32.mrb[0].mxu0
    %v1925 = vadd.f32 %v1652, %v1924
    %v1926 = vpop.f32.mrb[0].mxu0
    %1927 = vmatprep.mubr.f32.mxu0 0.0
    %v1928 = vand.u32 %v411, 4294901760
    %1929 = vmatmul.mubr.f32.gmra.mrb[0].mxu0 %v1928
    %v1930 = vpop.f32.mrb[0].mxu0
    %v1931 = vadd.f32 %v1660, %v1930
    %v1932 = vpop.f32.mrb[0].mxu0
    %1933 = vmatprep.mubr.f32.mxu0 0.0
    %v1934 = vand.u32 %v414, 4294901760
    %1935 = vmatmul.mubr.f32.gmra.mrb[0].mxu0 %v1934
    %v1936 = vpop.f32.mrb[0].mxu0
    %v1937 = vadd.f32 %v1668, %v1936
    %v1938 = vpop.f32.mrb[0].mxu0
    %1939 = vmatprep.mubr.f32.mxu0 0.0
    %v1940 = vand.u32 %v417, 4294901760
    %1941 = vmatmul.mubr.f32.gmra.mrb[0].mxu0 %v1940
    %v1942 = vpop.f32.mrb[0].mxu0
    %v1943 = vadd.f32 %v1676, %v1942
    %v1944 = vpop.f32.mrb[0].mxu0
    %1945 = vmatprep.mubr.f32.mxu0 0.0
    %v1946 = vand.u32 %v420, 4294901760
    %1947 = vmatmul.mubr.f32.gmra.mrb[0].mxu0 %v1946
    %v1948 = vpop.f32.mrb[0].mxu0
    %v1949 = vadd.f32 %v1684, %v1948
    %v1950 = vpop.f32.mrb[0].mxu0
    %1951 = vmatprep.mubr.f32.mxu0 0.0
    %v1952 = vand.u32 %v423, 4294901760
    %1953 = vmatmul.mubr.f32.gmra.mrb[0].mxu0 %v1952
    %v1954 = vpop.f32.mrb[0].mxu0
    %v1955 = vadd.f32 %v1692, %v1954
    %v1956 = vpop.f32.mrb[0].mxu0
    %1957 = vdwg.mxu0
    %1958 = vmatprep.subr.mxu0 0.0
    %v1959 = vand.u32 %v327, 4294901760
    %1960 = vmatpush1.msra.mxu0 %v1959
    %1961 = vmatprep.subr.mxu0 0.0
    %v1962 = vand.u32 %v328, 4294901760
    %1963 = vmatpush1.msra.mxu0 %v1962
    %1964 = vmatprep.subr.mxu0 0.0
    %1965 = vmatpush1.msra.mxu0 0.0
    %1966 = vmatprep.subr.mxu0 0.0
    %1967 = vmatpush1.msra.mxu0 0.0
    %1968 = vmatprep.subr.mxu0 0.0
    %1969 = vmatpush1.msra.mxu0 0.0
    %1970 = vmatprep.subr.mxu0 0.0
    %1971 = vmatpush1.msra.mxu0 0.0
    %1972 = vmatprep.subr.mxu0 0.0
    %1973 = vmatpush1.msra.mxu0 0.0
    %1974 = vmatprep.subr.mxu0 0.0
    %1975 = vmatpush1.msra.mxu0 0.0
    %1976 = vmatprep.subr.mxu0 0.0
    %1977 = vmatpush1.msra.mxu0 0.0
    %1978 = vmatprep.subr.mxu0 0.0
    %1979 = vmatpush1.msra.mxu0 0.0
    %1980 = vmatprep.subr.mxu0 0.0
    %1981 = vmatpush1.msra.mxu0 0.0
    %1982 = vmatprep.subr.mxu0 0.0
    %1983 = vmatpush1.msra.mxu0 0.0
    %1984 = vmatprep.subr.mxu0 0.0
    %1985 = vmatpush1.msra.mxu0 0.0
    %1986 = vmatprep.subr.mxu0 0.0
    %1987 = vmatpush1.msra.mxu0 0.0
    %1988 = vmatprep.subr.mxu0 0.0
    %1989 = vmatpush1.msra.mxu0 0.0
    %1990 = vmatprep.subr.mxu0 0.0
    %1991 = vmatpush1.msra.mxu0 0.0
    %1992 = vmatprep.subr.mxu0 0.0
    %1993 = vmatpush1.msra.mxu0 0.0
    %1994 = vmatprep.subr.mxu0 0.0
    %1995 = vmatpush1.msra.mxu0 0.0
    %1996 = vmatprep.subr.mxu0 0.0
    %1997 = vmatpush1.msra.mxu0 0.0
    %1998 = vmatprep.subr.mxu0 0.0
    %1999 = vmatpush1.msra.mxu0 0.0
    %2000 = vmatprep.subr.mxu0 0.0
    %2001 = vmatpush1.msra.mxu0 0.0
    %2002 = vmatprep.subr.mxu0 0.0
    %2003 = vmatpush1.msra.mxu0 0.0
    %2004 = vmatprep.subr.mxu0 0.0
    %2005 = vmatpush1.msra.mxu0 0.0
    %2006 = vmatprep.subr.mxu0 0.0
    %2007 = vmatpush1.msra.mxu0 0.0
    %2008 = vmatprep.subr.mxu0 0.0
    %2009 = vmatpush1.msra.mxu0 0.0
    %2010 = vmatprep.subr.mxu0 0.0
    %2011 = vmatpush1.msra.mxu0 0.0
    %2012 = vmatprep.subr.mxu0 0.0
    %2013 = vmatpush1.msra.mxu0 0.0
    %2014 = vmatprep.subr.mxu0 0.0
    %2015 = vmatpush1.msra.mxu0 0.0
    %2016 = vmatprep.subr.mxu0 0.0
    %2017 = vmatpush1.msra.mxu0 0.0
    %2018 = vmatprep.subr.mxu0 0.0
    %2019 = vmatpush1.msra.mxu0 0.0
    %2020 = vmatprep.subr.mxu0 0.0
    %2021 = vmatpush1.msra.mxu0 0.0
    %2022 = vmatprep.subr.mxu0 0.0
    %2023 = vmatpush1.msra.mxu0 0.0
    %2024 = vmatprep.mubr.f32.mxu0 0.0
    %v2025 = vand.u32 %v330, 4294901760
    %2026 = vmatmul.mubr.f32.gmra.mrb[0].mxu0 %v2025
    %v2027 = vpop.f32.mrb[0].mxu0
    %v2028 = vadd.f32 %v1769, %v2027
    %v2029 = vpop.f32.mrb[0].mxu0
    %2030 = vmatprep.mubr.f32.mxu0 0.0
    %v2031 = vand.u32 %v333, 4294901760
    %2032 = vmatmul.mubr.f32.gmra.mrb[0].mxu0 %v2031
    %v2033 = vpop.f32.mrb[0].mxu0
    %v2034 = vadd.f32 %v1775, %v2033
    %v2035 = vpop.f32.mrb[0].mxu0
    %2036 = vmatprep.mubr.f32.mxu0 0.0
    %v2037 = vand.u32 %v336, 4294901760
    %2038 = vmatmul.mubr.f32.gmra.mrb[0].mxu0 %v2037
    %v2039 = vpop.f32.mrb[0].mxu0
    %v2040 = vadd.f32 %v1781, %v2039
    %v2041 = vpop.f32.mrb[0].mxu0
    %2042 = vmatprep.mubr.f32.mxu0 0.0
    %v2043 = vand.u32 %v339, 4294901760
    %2044 = vmatmul.mubr.f32.gmra.mrb[0].mxu0 %v2043
    %v2045 = vpop.f32.mrb[0].mxu0
    %v2046 = vadd.f32 %v1787, %v2045
    %v2047 = vpop.f32.mrb[0].mxu0
    %2048 = vmatprep.mubr.f32.mxu0 0.0
    %v2049 = vand.u32 %v342, 4294901760
    %2050 = vmatmul.mubr.f32.gmra.mrb[0].mxu0 %v2049
    %v2051 = vpop.f32.mrb[0].mxu0
    %v2052 = vadd.f32 %v1793, %v2051
    %v2053 = vpop.f32.mrb[0].mxu0
    %2054 = vmatprep.mubr.f32.mxu0 0.0
    %v2055 = vand.u32 %v345, 4294901760
    %2056 = vmatmul.mubr.f32.gmra.mrb[0].mxu0 %v2055
    %v2057 = vpop.f32.mrb[0].mxu0
    %v2058 = vadd.f32 %v1799, %v2057
    %v2059 = vpop.f32.mrb[0].mxu0
    %2060 = vmatprep.mubr.f32.mxu0 0.0
    %v2061 = vand.u32 %v348, 4294901760
    %2062 = vmatmul.mubr.f32.gmra.mrb[0].mxu0 %v2061
    %v2063 = vpop.f32.mrb[0].mxu0
    %v2064 = vadd.f32 %v1805, %v2063
    %v2065 = vpop.f32.mrb[0].mxu0
    %2066 = vmatprep.mubr.f32.mxu0 0.0
    %v2067 = vand.u32 %v351, 4294901760
    %2068 = vmatmul.mubr.f32.gmra.mrb[0].mxu0 %v2067
    %v2069 = vpop.f32.mrb[0].mxu0
    %v2070 = vadd.f32 %v1811, %v2069
    %v2071 = vpop.f32.mrb[0].mxu0
    %2072 = vmatprep.mubr.f32.mxu0 0.0
    %v2073 = vand.u32 %v354, 4294901760
    %2074 = vmatmul.mubr.f32.gmra.mrb[0].mxu0 %v2073
    %v2075 = vpop.f32.mrb[0].mxu0
    %v2076 = vadd.f32 %v1817, %v2075
    %v2077 = vpop.f32.mrb[0].mxu0
    %2078 = vmatprep.mubr.f32.mxu0 0.0
    %v2079 = vand.u32 %v357, 4294901760
    %2080 = vmatmul.mubr.f32.gmra.mrb[0].mxu0 %v2079
    %v2081 = vpop.f32.mrb[0].mxu0
    %v2082 = vadd.f32 %v1823, %v2081
    %v2083 = vpop.f32.mrb[0].mxu0
    %2084 = vmatprep.mubr.f32.mxu0 0.0
    %v2085 = vand.u32 %v360, 4294901760
    %2086 = vmatmul.mubr.f32.gmra.mrb[0].mxu0 %v2085
    %v2087 = vpop.f32.mrb[0].mxu0
    %v2088 = vadd.f32 %v1829, %v2087
    %v2089 = vpop.f32.mrb[0].mxu0
    %2090 = vmatprep.mubr.f32.mxu0 0.0
    %v2091 = vand.u32 %v363, 4294901760
    %2092 = vmatmul.mubr.f32.gmra.mrb[0].mxu0 %v2091
    %v2093 = vpop.f32.mrb[0].mxu0
    %v2094 = vadd.f32 %v1835, %v2093
    %v2095 = vpop.f32.mrb[0].mxu0
    %2096 = vmatprep.mubr.f32.mxu0 0.0
    %v2097 = vand.u32 %v366, 4294901760
    %2098 = vmatmul.mubr.f32.gmra.mrb[0].mxu0 %v2097
    %v2099 = vpop.f32.mrb[0].mxu0
    %v2100 = vadd.f32 %v1841, %v2099
    %v2101 = vpop.f32.mrb[0].mxu0
    %2102 = vmatprep.mubr.f32.mxu0 0.0
    %v2103 = vand.u32 %v369, 4294901760
    %2104 = vmatmul.mubr.f32.gmra.mrb[0].mxu0 %v2103
    %v2105 = vpop.f32.mrb[0].mxu0
    %v2106 = vadd.f32 %v1847, %v2105
    %v2107 = vpop.f32.mrb[0].mxu0
    %2108 = vmatprep.mubr.f32.mxu0 0.0
    %v2109 = vand.u32 %v372, 4294901760
    %2110 = vmatmul.mubr.f32.gmra.mrb[0].mxu0 %v2109
    %v2111 = vpop.f32.mrb[0].mxu0
    %v2112 = vadd.f32 %v1853, %v2111
    %v2113 = vpop.f32.mrb[0].mxu0
    %2114 = vmatprep.mubr.f32.mxu0 0.0
    %v2115 = vand.u32 %v375, 4294901760
    %2116 = vmatmul.mubr.f32.gmra.mrb[0].mxu0 %v2115
    %v2117 = vpop.f32.mrb[0].mxu0
    %v2118 = vadd.f32 %v1859, %v2117
    %v2119 = vpop.f32.mrb[0].mxu0
    %2120 = vmatprep.mubr.f32.mxu0 0.0
    %v2121 = vand.u32 %v378, 4294901760
    %2122 = vmatmul.mubr.f32.gmra.mrb[0].mxu0 %v2121
    %v2123 = vpop.f32.mrb[0].mxu0
    %v2124 = vadd.f32 %v1865, %v2123
    %v2125 = vpop.f32.mrb[0].mxu0
    %2126 = vmatprep.mubr.f32.mxu0 0.0
    %v2127 = vand.u32 %v381, 4294901760
    %2128 = vmatmul.mubr.f32.gmra.mrb[0].mxu0 %v2127
    %v2129 = vpop.f32.mrb[0].mxu0
    %v2130 = vadd.f32 %v1871, %v2129
    %v2131 = vpop.f32.mrb[0].mxu0
    %2132 = vmatprep.mubr.f32.mxu0 0.0
    %v2133 = vand.u32 %v384, 4294901760
    %2134 = vmatmul.mubr.f32.gmra.mrb[0].mxu0 %v2133
    %v2135 = vpop.f32.mrb[0].mxu0
    %v2136 = vadd.f32 %v1877, %v2135
    %v2137 = vpop.f32.mrb[0].mxu0
    %2138 = vmatprep.mubr.f32.mxu0 0.0
    %v2139 = vand.u32 %v387, 4294901760
    %2140 = vmatmul.mubr.f32.gmra.mrb[0].mxu0 %v2139
    %v2141 = vpop.f32.mrb[0].mxu0
    %v2142 = vadd.f32 %v1883, %v2141
    %v2143 = vpop.f32.mrb[0].mxu0
    %2144 = vmatprep.mubr.f32.mxu0 0.0
    %v2145 = vand.u32 %v390, 4294901760
    %2146 = vmatmul.mubr.f32.gmra.mrb[0].mxu0 %v2145
    %v2147 = vpop.f32.mrb[0].mxu0
    %v2148 = vadd.f32 %v1889, %v2147
    %v2149 = vpop.f32.mrb[0].mxu0
    %2150 = vmatprep.mubr.f32.mxu0 0.0
    %v2151 = vand.u32 %v393, 4294901760
    %2152 = vmatmul.mubr.f32.gmra.mrb[0].mxu0 %v2151
    %v2153 = vpop.f32.mrb[0].mxu0
    %v2154 = vadd.f32 %v1895, %v2153
    %v2155 = vpop.f32.mrb[0].mxu0
    %2156 = vmatprep.mubr.f32.mxu0 0.0
    %v2157 = vand.u32 %v396, 4294901760
    %2158 = vmatmul.mubr.f32.gmra.mrb[0].mxu0 %v2157
    %v2159 = vpop.f32.mrb[0].mxu0
    %v2160 = vadd.f32 %v1901, %v2159
    %v2161 = vpop.f32.mrb[0].mxu0
    %2162 = vmatprep.mubr.f32.mxu0 0.0
    %v2163 = vand.u32 %v399, 4294901760
    %2164 = vmatmul.mubr.f32.gmra.mrb[0].mxu0 %v2163
    %v2165 = vpop.f32.mrb[0].mxu0
    %v2166 = vadd.f32 %v1907, %v2165
    %v2167 = vpop.f32.mrb[0].mxu0
    %2168 = vmatprep.mubr.f32.mxu0 0.0
    %v2169 = vand.u32 %v402, 4294901760
    %2170 = vmatmul.mubr.f32.gmra.mrb[0].mxu0 %v2169
    %v2171 = vpop.f32.mrb[0].mxu0
    %v2172 = vadd.f32 %v1913, %v2171
    %v2173 = vpop.f32.mrb[0].mxu0
    %2174 = vmatprep.mubr.f32.mxu0 0.0
    %v2175 = vand.u32 %v405, 4294901760
    %2176 = vmatmul.mubr.f32.gmra.mrb[0].mxu0 %v2175
    %v2177 = vpop.f32.mrb[0].mxu0
    %v2178 = vadd.f32 %v1919, %v2177
    %v2179 = vpop.f32.mrb[0].mxu0
    %2180 = vmatprep.mubr.f32.mxu0 0.0
    %v2181 = vand.u32 %v408, 4294901760
    %2182 = vmatmul.mubr.f32.gmra.mrb[0].mxu0 %v2181
    %v2183 = vpop.f32.mrb[0].mxu0
    %v2184 = vadd.f32 %v1925, %v2183
    %v2185 = vpop.f32.mrb[0].mxu0
    %2186 = vmatprep.mubr.f32.mxu0 0.0
    %v2187 = vand.u32 %v411, 4294901760
    %2188 = vmatmul.mubr.f32.gmra.mrb[0].mxu0 %v2187
    %v2189 = vpop.f32.mrb[0].mxu0
    %v2190 = vadd.f32 %v1931, %v2189
    %v2191 = vpop.f32.mrb[0].mxu0
    %2192 = vmatprep.mubr.f32.mxu0 0.0
    %v2193 = vand.u32 %v414, 4294901760
    %2194 = vmatmul.mubr.f32.gmra.mrb[0].mxu0 %v2193
    %v2195 = vpop.f32.mrb[0].mxu0
    %v2196 = vadd.f32 %v1937, %v2195
    %v2197 = vpop.f32.mrb[0].mxu0
    %2198 = vmatprep.mubr.f32.mxu0 0.0
    %v2199 = vand.u32 %v417, 4294901760
    %2200 = vmatmul.mubr.f32.gmra.mrb[0].mxu0 %v2199
    %v2201 = vpop.f32.mrb[0].mxu0
    %v2202 = vadd.f32 %v1943, %v2201
    %v2203 = vpop.f32.mrb[0].mxu0
    %2204 = vmatprep.mubr.f32.mxu0 0.0
    %v2205 = vand.u32 %v420, 4294901760
    %2206 = vmatmul.mubr.f32.gmra.mrb[0].mxu0 %v2205
    %v2207 = vpop.f32.mrb[0].mxu0
    %v2208 = vadd.f32 %v1949, %v2207
    %v2209 = vpop.f32.mrb[0].mxu0
    %2210 = vmatprep.mubr.f32.mxu0 0.0
    %v2211 = vand.u32 %v423, 4294901760
    %2212 = vmatmul.mubr.f32.gmra.mrb[0].mxu0 %v2211
    %v2213 = vpop.f32.mrb[0].mxu0
    %v2214 = vadd.f32 %v1955, %v2213
    %v2215 = vpop.f32.mrb[0].mxu0
    %2216 = vdwg.mxu0
    %v2217 = vadd.f32 %v2028, 1e-08
    %v2218 = vadd.f32 %v2034, 1e-08
    %v2219 = vadd.f32 %v2040, 1e-08
    %v2220 = vadd.f32 %v2046, 1e-08
    %v2221 = vadd.f32 %v2052, 1e-08
    %v2222 = vadd.f32 %v2058, 1e-08
    %v2223 = vadd.f32 %v2064, 1e-08
    %v2224 = vadd.f32 %v2070, 1e-08
    %v2225 = vadd.f32 %v2076, 1e-08
    %v2226 = vadd.f32 %v2082, 1e-08
    %v2227 = vadd.f32 %v2088, 1e-08
    %v2228 = vadd.f32 %v2094, 1e-08
    %v2229 = vadd.f32 %v2100, 1e-08
    %v2230 = vadd.f32 %v2106, 1e-08
    %v2231 = vadd.f32 %v2112, 1e-08
    %v2232 = vadd.f32 %v2118, 1e-08
    %v2233 = vrcp.pop %v2217
    %v2234 = vrcp.pop %v2218
    %v2235 = vrcp.pop %v2219
    %v2236 = vrcp.pop %v2220
    %v2237 = vrcp.pop %v2221
    %v2238 = vrcp.pop %v2222
    %v2239 = vrcp.pop %v2223
    %v2240 = vrcp.pop %v2224
    %v2241 = vrcp.pop %v2225
    %v2242 = vrcp.pop %v2226
    %v2243 = vrcp.pop %v2227
    %v2244 = vrcp.pop %v2228
    %v2245 = vrcp.pop %v2229
    %v2246 = vrcp.pop %v2230
    %v2247 = vrcp.pop %v2231
    %v2248 = vrcp.pop %v2232
    %v2249 = vmul.f32 %v2217, %v2233
    %v2250 = vmul.f32 %v2218, %v2234
    %v2251 = vmul.f32 %v2219, %v2235
    %v2252 = vmul.f32 %v2220, %v2236
    %v2253 = vmul.f32 %v2221, %v2237
    %v2254 = vmul.f32 %v2222, %v2238
    %v2255 = vmul.f32 %v2223, %v2239
    %v2256 = vmul.f32 %v2224, %v2240
    %v2257 = vmul.f32 %v2225, %v2241
    %v2258 = vmul.f32 %v2226, %v2242
    %v2259 = vmul.f32 %v2227, %v2243
    %v2260 = vmul.f32 %v2228, %v2244
    %v2261 = vmul.f32 %v2229, %v2245
    %v2262 = vmul.f32 %v2230, %v2246
    %v2263 = vmul.f32 %v2231, %v2247
    %v2264 = vmul.f32 %v2232, %v2248
    %v2265 = vsub.f32 2.0, %v2249
    %v2266 = vsub.f32 2.0, %v2250
    %v2267 = vsub.f32 2.0, %v2251
    %v2268 = vsub.f32 2.0, %v2252
    %v2269 = vsub.f32 2.0, %v2253
    %v2270 = vsub.f32 2.0, %v2254
    %v2271 = vsub.f32 2.0, %v2255
    %v2272 = vsub.f32 2.0, %v2256
    %v2273 = vsub.f32 2.0, %v2257
    %v2274 = vsub.f32 2.0, %v2258
    %v2275 = vsub.f32 2.0, %v2259
    %v2276 = vsub.f32 2.0, %v2260
    %v2277 = vsub.f32 2.0, %v2261
    %v2278 = vsub.f32 2.0, %v2262
    %v2279 = vsub.f32 2.0, %v2263
    %v2280 = vsub.f32 2.0, %v2264
    %v2281 = vmul.f32 %v2233, %v2265
    %v2282 = vmul.f32 %v2234, %v2266
    %v2283 = vmul.f32 %v2235, %v2267
    %v2284 = vmul.f32 %v2236, %v2268
    %v2285 = vmul.f32 %v2237, %v2269
    %v2286 = vmul.f32 %v2238, %v2270
    %v2287 = vmul.f32 %v2239, %v2271
    %v2288 = vmul.f32 %v2240, %v2272
    %v2289 = vmul.f32 %v2241, %v2273
    %v2290 = vmul.f32 %v2242, %v2274
    %v2291 = vmul.f32 %v2243, %v2275
    %v2292 = vmul.f32 %v2244, %v2276
    %v2293 = vmul.f32 %v2245, %v2277
    %v2294 = vmul.f32 %v2246, %v2278
    %v2295 = vmul.f32 %v2247, %v2279
    %v2296 = vmul.f32 %v2248, %v2280
    %v2297 = vmul.f32 %v2124, %v2281
    %v2298 = vmul.f32 %v2130, %v2282
    %v2299 = vmul.f32 %v2136, %v2283
    %v2300 = vmul.f32 %v2142, %v2284
    %v2301 = vmul.f32 %v2148, %v2285
    %v2302 = vmul.f32 %v2154, %v2286
    %v2303 = vmul.f32 %v2160, %v2287
    %v2304 = vmul.f32 %v2166, %v2288
    %v2305 = vmul.f32 %v2172, %v2289
    %v2306 = vmul.f32 %v2178, %v2290
    %v2307 = vmul.f32 %v2184, %v2291
    %v2308 = vmul.f32 %v2190, %v2292
    %v2309 = vmul.f32 %v2196, %v2293
    %v2310 = vmul.f32 %v2202, %v2294
    %v2311 = vmul.f32 %v2208, %v2295
    %v2312 = vmul.f32 %v2214, %v2296
    %vm2313 = vcmask 121856
    %2314 = vst.msk [vmem:[%s1] sm:$0xff] %vm2313, %v2297
    %vm2315 = vcmask 120832
    %2316 = vst.msk [vmem:[%s1 + $0x8] sm:$0x7f] %vm2315, %v2298
    %2317 = vst.msk [vmem:[%s1 + $0x10] sm:$0xff] %vm2313, %v2299
    %2318 = vst.msk [vmem:[%s1 + $0x18] sm:$0x7f] %vm2315, %v2300
    %2319 = vst.msk [vmem:[%s1 + $0x20] sm:$0xff] %vm2313, %v2301
    %2320 = vst.msk [vmem:[%s1 + $0x28] sm:$0x7f] %vm2315, %v2302
    %2321 = vst.msk [vmem:[%s1 + $0x30] sm:$0xff] %vm2313, %v2303
    %2322 = vst.msk [vmem:[%s1 + $0x38] sm:$0x7f] %vm2315, %v2304
    %2323 = vst.msk [vmem:[%s1 + $0x40] sm:$0xff] %vm2313, %v2305
    %2324 = vst.msk [vmem:[%s1 + $0x48] sm:$0x7f] %vm2315, %v2306
    %2325 = vst.msk [vmem:[%s1 + $0x50] sm:$0xff] %vm2313, %v2307
    %2326 = vst.msk [vmem:[%s1 + $0x58] sm:$0x7f] %vm2315, %v2308
    %2327 = vst.msk [vmem:[%s1 + $0x60] sm:$0xff] %vm2313, %v2309
    %2328 = vst.msk [vmem:[%s1 + $0x68] sm:$0x7f] %vm2315, %v2310
    %2329 = vst.msk [vmem:[%s1 + $0x70] sm:$0xff] %vm2313, %v2311
    %2330 = vst.msk [vmem:[%s1 + $0x78] sm:$0x7f] %vm2315, %v2312
    // Predicated region
    $region10: #{tpu_custom_call.1} parent=1 // pred_check
      _
    $region11: #{tpu_custom_call.1} parent=1 // pred_check_branch
      %2332 = sbr.rel (0) target = $region13
    $region12: #{tpu_custom_call.1} parent=1 // pred_region
      _
    $region13: #{tpu_custom_call.1} parent=1 // pred_fallthru
      _
    // Predicated region
    $region14: #{tpu_custom_call.1} parent=1 // pred_check
      _
    $region15: #{tpu_custom_call.1} parent=1 // pred_check_branch
      %2334 = sbr.rel (0) target = $region17
    $region16: #{tpu_custom_call.1} parent=1 // pred_region
      _
    $region17: #{tpu_custom_call.1} parent=1 // pred_fallthru
      _
    %2335 = vsyncpa [#allocation4], 1

</llo_original>
